<compile_context>
chip_gen: v6e
topology: v6e:2x2x1
jax: 0.10.0
libtpu: 0.0.40
codegen_flags: <defaults>
</compile_context>

<pallas_src>
import math
import functools

import jax
import jax.numpy as jnp
from jax import lax
from jax.experimental import pallas as pl
from jax.experimental.pallas import tpu as pltpu

_NEG_CLIP = -1e9
_POS_CLIP = 1e9


# ---------------------------------------------------------------------------
# In-kernel helpers
# ---------------------------------------------------------------------------
def _layernorm(z, gamma, beta, eps):
    mean = jnp.mean(z, axis=-1, keepdims=True)
    var = jnp.mean((z - mean) ** 2, axis=-1, keepdims=True)
    return gamma * ((z - mean) * lax.rsqrt(var + eps)) + beta


def _mha_proj(q_all, k_all, v_all, keep, wo_bf16, num_heads, hd):
    """All-heads attention + output projection, heads as a reduction.

    q_all [St, D], k_all/v_all [Ss, D]  (head h occupies cols [h*hd,(h+1)*hd)),
    keep  [St, Ss] bool keep-mask (computed once, shared by all heads),
    wo    [D, D] bf16.
    Returns sum_h softmax(mask(q_h k_h^T / sqrt(hd))) v_h @ wo[h*hd:(h+1)*hd, :]
    as f32 [St, D]  (== concat(heads) @ wo, without the concatenate relayout).
    """
    scale = 1.0 / math.sqrt(hd)
    St = q_all.shape[0]
    D = wo_bf16.shape[1]
    acc = jnp.zeros((St, D), jnp.float32)
    for h in range(num_heads):
        lo, hi = h * hd, (h + 1) * hd
        qh = (q_all[:, lo:hi] * scale).astype(jnp.bfloat16)   # scale folded into q
        kh = k_all[:, lo:hi].astype(jnp.bfloat16)
        vh = v_all[:, lo:hi].astype(jnp.bfloat16)
        # q @ k^T, contracting head_dim directly (no k.T materialization)
        s = lax.dot_general(qh, kh, (((1,), (1,)), ((), ())),
                            preferred_element_type=jnp.float32)
        # masked_fill(-inf) + clamp(-1e9, 1e9)  ->  exact -1e9 on masked entries
        s = jnp.where(keep, jnp.clip(s, _NEG_CLIP, _POS_CLIP), _NEG_CLIP)
        s = s - jnp.max(s, axis=-1, keepdims=True)
        p = jnp.exp(s)
        p = p * pl.reciprocal(jnp.sum(p, axis=-1, keepdims=True), approx=True)
        vals = jnp.dot(p.astype(jnp.bfloat16), vh,
                       preferred_element_type=jnp.float32)
        acc = acc + jnp.dot(vals.astype(jnp.bfloat16), wo_bf16[lo:hi, :],
                            preferred_element_type=jnp.float32)
    return acc


# ---------------------------------------------------------------------------
# Fused Pallas kernels
# ---------------------------------------------------------------------------
def _self_attn_block_kernel(lens_ref, y_ref, wqkv_ref, bqkv_ref, wo_ref, bo_ref,
                            g_ref, b_ref, o_ref, *, num_heads, eps):
    b = pl.program_id(0)
    y = y_ref[...]                                       # [S, D] f32
    S, D = y.shape
    hd = D // num_heads

    qkv = jnp.dot(y.astype(jnp.bfloat16), wqkv_ref[...],
                  preferred_element_type=jnp.float32) + bqkv_ref[...]   # [S, 3D]

    # causal + padding keep-mask rebuilt from the valid length (SMEM scalar)
    L = lens_ref[b]
    rows = lax.broadcasted_iota(jnp.int32, (S, S), 0)
    cols = lax.broadcasted_iota(jnp.int32, (S, S), 1)
    keep = (cols <= rows) & (rows < L) & (cols < L)

    # packed layout: [ Q heads | K heads | V heads ]
    proj = _mha_proj(qkv[:, 0:D], qkv[:, D:2 * D], qkv[:, 2 * D:3 * D],
                     keep, wo_ref[...], num_heads, hd) + bo_ref[...]
    o_ref[...] = _layernorm(y + proj, g_ref[...], b_ref[...], eps).astype(o_ref.dtype)


def _cross_attn_block_kernel(tlen_ref, slen_ref, y_ref, x_ref, wkv_ref, bkv_ref,
                             wq_ref, bq_ref, wo_ref, bo_ref, g_ref, b_ref,
                             o_ref, *, num_heads, eps):
    b = pl.program_id(0)
    y = y_ref[...]                                       # [St, D] decoder activations
    x = x_ref[...]                                       # [Ss, D] encoder output
    St, D = y.shape
    Ss = x.shape[0]
    hd = D // num_heads

    kv = jnp.dot(x.astype(jnp.bfloat16), wkv_ref[...],
                 preferred_element_type=jnp.float32) + bkv_ref[...]     # [Ss, 2D]
    q = jnp.dot(y.astype(jnp.bfloat16), wq_ref[...],
                preferred_element_type=jnp.float32) + bq_ref[...]       # [St, D]

    rows = lax.broadcasted_iota(jnp.int32, (St, Ss), 0)
    cols = lax.broadcasted_iota(jnp.int32, (St, Ss), 1)
    keep = (rows < tlen_ref[b]) & (cols < slen_ref[b])

    # packed layout: [ K heads | V heads ]
    proj = _mha_proj(q, kv[:, 0:D], kv[:, D:2 * D],
                     keep, wo_ref[...], num_heads, hd) + bo_ref[...]
    o_ref[...] = _layernorm(y + proj, g_ref[...], b_ref[...], eps).astype(o_ref.dtype)


def _ffn_block_kernel(y_ref, w1_ref, b1_ref, w2_ref, b2_ref, g_ref, b_ref,
                      o_ref, *, eps):
    y = y_ref[...]                                       # [TM, D] f32
    h = jnp.dot(y.astype(jnp.bfloat16), w1_ref[...],
                preferred_element_type=jnp.float32) + b1_ref[...]
    h = jnp.maximum(h, 0.0)                              # ReLU (dropout = identity)
    f = jnp.dot(h.astype(jnp.bfloat16), w2_ref[...],
                preferred_element_type=jnp.float32) + b2_ref[...]
    o_ref[...] = _layernorm(y + f, g_ref[...], b_ref[...], eps).astype(o_ref.dtype)


# ---------------------------------------------------------------------------
# Weight repacking: fused per-head [q|k|v] columns -> part-major [Q..|K..|V..]
# ---------------------------------------------------------------------------
def _repack_fused_heads(w, b, num_heads, parts):
    d_in, d_out = w.shape
    hd = d_out // (num_heads * parts)
    w_p = (w.reshape(d_in, num_heads, parts, hd)
            .transpose(0, 2, 1, 3).reshape(d_in, d_out))
    b_p = b.reshape(num_heads, parts, hd).transpose(1, 0, 2).reshape(d_out)
    return w_p, b_p


# ---------------------------------------------------------------------------
# pallas_call wrappers
# ---------------------------------------------------------------------------
_VMEM_LIMIT = 32 * 1024 * 1024   # raises v5e's 16 MiB scoped default; safe on v6e/v7x


def self_attention_block(y, p, tgt_lens, norm_g, norm_b, num_heads, eps=1e-5):
    B, S, D = y.shape
    w_qkv, b_qkv = _repack_fused_heads(p["w_qkv"], p["b_qkv"], num_heads, 3)
    kernel = functools.partial(_self_attn_block_kernel,
                               num_heads=num_heads, eps=eps)
    return pl.pallas_call(
        kernel,
        out_shape=jax.ShapeDtypeStruct((B, S, D), jnp.float32),
        grid_spec=pltpu.PrefetchScalarGridSpec(
            num_scalar_prefetch=1,
            grid=(B,),
            in_specs=[
                pl.BlockSpec((None, S, D), lambda b, l: (b, 0, 0)),   # y
                pl.BlockSpec((D, 3 * D), lambda b, l: (0, 0)),        # w_qkv (bf16, resident)
                pl.BlockSpec((1, 3 * D), lambda b, l: (0, 0)),        # b_qkv
                pl.BlockSpec((D, D), lambda b, l: (0, 0)),            # w_o (bf16)
                pl.BlockSpec((1, D), lambda b, l: (0, 0)),            # b_o
                pl.BlockSpec((1, D), lambda b, l: (0, 0)),            # gamma
                pl.BlockSpec((1, D), lambda b, l: (0, 0)),            # beta
            ],
            out_specs=pl.BlockSpec((None, S, D), lambda b, l: (b, 0, 0)),
        ),
        compiler_params=pltpu.CompilerParams(
            dimension_semantics=("parallel",),
            vmem_limit_bytes=_VMEM_LIMIT),
    )(tgt_lens.astype(jnp.int32), y,
      w_qkv.astype(jnp.bfloat16), b_qkv.reshape(1, 3 * D),
      p["w_o"].astype(jnp.bfloat16), p["b_o"].reshape(1, D),
      norm_g.reshape(1, D), norm_b.reshape(1, D))


def cross_attention_block(y, x_enc, p, tgt_lens, src_lens, norm_g, norm_b,
                          num_heads, eps=1e-5):
    B, St, D = y.shape
    Ss = x_enc.shape[1]
    w_kv, b_kv = _repack_fused_heads(p["w_kv"], p["b_kv"], num_heads, 2)
    kernel = functools.partial(_cross_attn_block_kernel,
                               num_heads=num_heads, eps=eps)
    return pl.pallas_call(
        kernel,
        out_shape=jax.ShapeDtypeStruct((B, St, D), jnp.float32),
        grid_spec=pltpu.PrefetchScalarGridSpec(
            num_scalar_prefetch=2,
            grid=(B,),
            in_specs=[
                pl.BlockSpec((None, St, D), lambda b, tl, sl: (b, 0, 0)),  # y
                pl.BlockSpec((None, Ss, D), lambda b, tl, sl: (b, 0, 0)),  # encoder out
                pl.BlockSpec((D, 2 * D), lambda b, tl, sl: (0, 0)),        # w_kv (bf16)
                pl.BlockSpec((1, 2 * D), lambda b, tl, sl: (0, 0)),        # b_kv
                pl.BlockSpec((D, D), lambda b, tl, sl: (0, 0)),            # w_q (bf16)
                pl.BlockSpec((1, D), lambda b, tl, sl: (0, 0)),            # b_q
                pl.BlockSpec((D, D), lambda b, tl, sl: (0, 0)),            # w_o (bf16)
                pl.BlockSpec((1, D), lambda b, tl, sl: (0, 0)),            # b_o
                pl.BlockSpec((1, D), lambda b, tl, sl: (0, 0)),            # gamma
                pl.BlockSpec((1, D), lambda b, tl, sl: (0, 0)),            # beta
            ],
            out_specs=pl.BlockSpec((None, St, D), lambda b, tl, sl: (b, 0, 0)),
        ),
        compiler_params=pltpu.CompilerParams(
            dimension_semantics=("parallel",),
            vmem_limit_bytes=_VMEM_LIMIT),
    )(tgt_lens.astype(jnp.int32), src_lens.astype(jnp.int32), y, x_enc,
      w_kv.astype(jnp.bfloat16), b_kv.reshape(1, 2 * D),
      p["w_q"].astype(jnp.bfloat16), p["b_q"].reshape(1, D),
      p["w_o"].astype(jnp.bfloat16), p["b_o"].reshape(1, D),
      norm_g.reshape(1, D), norm_b.reshape(1, D))


def _pick_row_tile(M):
    # Largest tile <= 512 that evenly divides M (big tiles amortize the
    # ~0.35us/step overhead at real sizes; falls back to full M at toy sizes).
    for tm in (512, 256, 128, 64, 32, 16, 8):
        if M % tm == 0:
            return tm
    return M


def ffn_block(y2d, w1, b1, w2, b2, norm_g, norm_b, eps=1e-5):
    M, D = y2d.shape
    Hid = w1.shape[1]
    TM = _pick_row_tile(M)
    kernel = functools.partial(_ffn_block_kernel, eps=eps)
    return pl.pallas_call(
        kernel,
        out_shape=jax.ShapeDtypeStruct((M, D), jnp.float32),
        grid=(M // TM,),
        in_specs=[
            pl.BlockSpec((TM, D), lambda i: (i, 0)),              # activations (tiled)
            pl.BlockSpec((D, Hid), lambda i: (0, 0)),             # w1 (bf16, resident)
            pl.BlockSpec((1, Hid), lambda i: (0, 0)),
            pl.BlockSpec((Hid, D), lambda i: (0, 0)),             # w2 (bf16, resident)
            pl.BlockSpec((1, D), lambda i: (0, 0)),
            pl.BlockSpec((1, D), lambda i: (0, 0)),               # gamma
            pl.BlockSpec((1, D), lambda i: (0, 0)),               # beta
        ],
        out_specs=pl.BlockSpec((TM, D), lambda i: (i, 0)),
        compiler_params=pltpu.CompilerParams(
            dimension_semantics=("parallel",),
            vmem_limit_bytes=_VMEM_LIMIT),
    )(y2d, w1.astype(jnp.bfloat16), b1.reshape(1, Hid),
      w2.astype(jnp.bfloat16), b2.reshape(1, D),
      norm_g.reshape(1, D), norm_b.reshape(1, D))


# ---------------------------------------------------------------------------
# Module-level forward (three fused pallas_calls)
# ---------------------------------------------------------------------------
def decoder_block_forward(y, encoder_output, tgt_lens, src_lens, params,
                          num_heads, eps=1e-5):
    B, S, D = y.shape
    # self attention + add&norm (fused)
    y = self_attention_block(y, params["self_attn"], tgt_lens,
                             params["norm1_g"], params["norm1_b"],
                             num_heads, eps)
    # cross attention + add&norm (fused)
    if encoder_output is not None:
        y = cross_attention_block(y, encoder_output, params["cross_attn"],
                                  tgt_lens, src_lens,
                                  params["norm2_g"], params["norm2_b"],
                                  num_heads, eps)
    # feed-forward + add&norm (fused, row-tiled)
    y = ffn_block(y.reshape(B * S, D), params["ffn_w1"], params["ffn_b1"],
                  params["ffn_w2"], params["ffn_b2"],
                  params["norm3_g"], params["norm3_b"], eps).reshape(B, S, D)
    return y


# ---------------------------------------------------------------------------
# Mask helpers (PyTorch `cross_mask` semantics) — used only by the reference
# ---------------------------------------------------------------------------
def make_cross_mask(src_seq, tgt_seq, src_pad=0, tgt_pad=0):
    src_valid = src_seq != src_pad                       # [B, Ss]
    tgt_valid = tgt_seq != tgt_pad                       # [B, St]
    m = src_valid[:, None, :] & tgt_valid[:, :, None]    # [B, St, Ss]
    return m[:, None, :, :]                              # [B, 1, St, Ss]


def make_self_mask(tgt_seq, tgt_pad=0):
    B, St = tgt_seq.shape
    valid = tgt_seq != tgt_pad
    causal = jnp.tril(jnp.ones((St, St), dtype=bool))
    m = valid[:, None, :] & valid[:, :, None] & causal[None]
    return m[:, None, :, :]                              # [B, 1, St, St]


# ---------------------------------------------------------------------------
# Deterministic parameter init (PyTorch nn.Linear-style uniform)
# ---------------------------------------------------------------------------
def _lin_init(key, fan_in, fan_out):
    kw, kb = jax.random.split(key)
    bound = 1.0 / math.sqrt(fan_in)
    w = jax.random.uniform(kw, (fan_in, fan_out), jnp.float32, -bound, bound)
    b = jax.random.uniform(kb, (fan_out,), jnp.float32, -bound, bound)
    return w, b


def init_params(key, d_model, num_heads, hidden):
    ks = jax.random.split(key, 8)
    w_qkv, b_qkv = _lin_init(ks[0], d_model, 3 * d_model)
    w_so, b_so = _lin_init(ks[1], d_model, d_model)
    w_kv, b_kv = _lin_init(ks[2], d_model, 2 * d_model)
    w_q, b_q = _lin_init(ks[3], d_model, d_model)
    w_co, b_co = _lin_init(ks[4], d_model, d_model)
    w1, b1 = _lin_init(ks[5], d_model, hidden)
    w2, b2 = _lin_init(ks[6], hidden, d_model)
    ones = jnp.ones((d_model,), jnp.float32)
    zeros = jnp.zeros((d_model,), jnp.float32)
    return {
        "self_attn": {"w_qkv": w_qkv, "b_qkv": b_qkv, "w_o": w_so, "b_o": b_so},
        "cross_attn": {"w_kv": w_kv, "b_kv": b_kv, "w_q": w_q, "b_q": b_q,
                       "w_o": w_co, "b_o": b_co},
        "ffn_w1": w1, "ffn_b1": b1, "ffn_w2": w2, "ffn_b2": b2,
        "norm1_g": ones, "norm1_b": zeros,
        "norm2_g": ones, "norm2_b": zeros,
        "norm3_g": ones, "norm3_b": zeros,
    }


# ---------------------------------------------------------------------------
# Pure-JAX f32 reference (mirrors the PyTorch code) for the correctness check
# ---------------------------------------------------------------------------
def _ref_attention(q, k, v, mask):
    d_k = q.shape[-1]
    s = jnp.einsum("bhqd,bhkd->bhqk", q, k) / math.sqrt(d_k)
    s = jnp.where(mask, s, -jnp.inf)
    s = jnp.clip(s, -1e9, 1e9)
    p = jax.nn.softmax(s, axis=-1)
    return jnp.einsum("bhqk,bhkd->bhqd", p, v)


def _ref_layernorm(x, g, b, eps=1e-5):
    mean = x.mean(-1, keepdims=True)
    var = ((x - mean) ** 2).mean(-1, keepdims=True)
    return g * (x - mean) / jnp.sqrt(var + eps) + b


def reference_forward(y, enc, self_mask, cross_mask_, params, num_heads, eps=1e-5):
    B, S, D = y.shape
    hd = D // num_heads
    p = params["self_attn"]
    qkv = y @ p["w_qkv"] + p["b_qkv"]
    qkv = qkv.reshape(B, S, num_heads, 3 * hd).transpose(0, 2, 1, 3)
    q, k, v = jnp.split(qkv, 3, axis=-1)
    vals = _ref_attention(q, k, v, self_mask).transpose(0, 2, 1, 3).reshape(B, S, D)
    attn = vals @ p["w_o"] + p["b_o"]
    y = _ref_layernorm(y + attn, params["norm1_g"], params["norm1_b"], eps)

    p = params["cross_attn"]
    Ss = enc.shape[1]
    kv = enc @ p["w_kv"] + p["b_kv"]
    q = y @ p["w_q"] + p["b_q"]
    kv = kv.reshape(B, Ss, num_heads, 2 * hd).transpose(0, 2, 1, 3)
    q = q.reshape(B, S, num_heads, hd).transpose(0, 2, 1, 3)
    k, v = jnp.split(kv, 2, axis=-1)
    vals = _ref_attention(q, k, v, cross_mask_).transpose(0, 2, 1, 3).reshape(B, S, D)
    ca = vals @ p["w_o"] + p["b_o"]
    y = _ref_layernorm(y + ca, params["norm2_g"], params["norm2_b"], eps)

    f = jnp.maximum(y @ params["ffn_w1"] + params["ffn_b1"], 0.0)
    f = f @ params["ffn_w2"] + params["ffn_b2"]
    y = _ref_layernorm(y + f, params["norm3_g"], params["norm3_b"], eps)
    return y


# ---------------------------------------------------------------------------
if __name__ == "__main__":
    B, S_TGT, S_SRC = 2, 8, 8
    D_MODEL, NUM_HEADS, HIDDEN = 32, 4, 64
    # drop_prob is irrelevant at inference (dropout = identity)
    # TODO(synk): training-mode dropout (random masking) is not implemented.

    key = jax.random.PRNGKey(0)
    k_p, k_y, k_x = jax.random.split(key, 3)
    params = init_params(k_p, D_MODEL, NUM_HEADS, HIDDEN)

    y = jax.random.normal(k_y, (B, S_TGT, D_MODEL), jnp.float32)
    encoder_output = jax.random.normal(k_x, (B, S_SRC, D_MODEL), jnp.float32)

    # token-id sequences with trailing padding (= 0); only the lengths feed the
    # kernels (scalar prefetch), the dense masks are used by the f32 reference.
    tgt_seq = jnp.array([[3, 7, 1, 4, 2, 0, 0, 0],
                         [5, 2, 9, 6, 1, 8, 0, 0]], dtype=jnp.int32)
    src_seq = jnp.array([[2, 4, 6, 8, 1, 3, 0, 0],
                         [7, 5, 3, 0, 0, 0, 0, 0]], dtype=jnp.int32)
    tgt_lens = jnp.sum(tgt_seq != 0, axis=-1).astype(jnp.int32)   # [5, 6]
    src_lens = jnp.sum(src_seq != 0, axis=-1).astype(jnp.int32)   # [6, 3]

    out = decoder_block_forward(y, encoder_output, tgt_lens, src_lens,
                                params, NUM_HEADS)
    out = jax.block_until_ready(out)

    self_mask_b = make_self_mask(tgt_seq)                    # [B,1,St,St] bool
    cross_mask_b = make_cross_mask(src_seq, tgt_seq)         # [B,1,St,Ss] bool
    ref = reference_forward(y, encoder_output, self_mask_b, cross_mask_b,
                            params, NUM_HEADS)

    assert out.shape == (B, S_TGT, D_MODEL)
    max_err = float(jnp.max(jnp.abs(out - ref)))
    # bf16 matmuls with f32 accumulation vs f32 reference -> relaxed tolerance
    assert jnp.allclose(out, ref, atol=5e-2, rtol=5e-2), (
        "mismatch vs reference, max abs err = %g" % max_err)

    print("KERNEL_OK")
</pallas_src>

<mosaic_0001>
module attributes {stable_mosaic.version = 11 : i64} {
  func.func @_self_attn_block_kernel(%arg0: i32, %arg1: memref<2xi32, #tpu.memory_space<smem>>, %arg2: memref<1x8x32xf32, #tpu.memory_space<vmem>>, %arg3: memref<32x96xbf16, #tpu.memory_space<vmem>>, %arg4: memref<1x96xf32, #tpu.memory_space<vmem>>, %arg5: memref<32x32xbf16, #tpu.memory_space<vmem>>, %arg6: memref<1x32xf32, #tpu.memory_space<vmem>>, %arg7: memref<1x32xf32, #tpu.memory_space<vmem>>, %arg8: memref<1x32xf32, #tpu.memory_space<vmem>>, %arg9: memref<1x8x32xf32, #tpu.memory_space<vmem>>) attributes {dimension_semantics = [#tpu.dimension_semantics<parallel>], iteration_bounds = array<i64: 2>, scalar_prefetch = 1 : i64, scratch_operands = 0 : i64, tpu.core_type = #tpu.core_type<tc>, window_params = [{transform_indices = @transform_0, window_bounds = array<i64: 1, 8, 32>}, {pipeline_mode = #tpu.pipeline_mode<synchronous>, transform_indices = @transform_1, window_bounds = array<i64: 32, 96>}, {pipeline_mode = #tpu.pipeline_mode<synchronous>, transform_indices = @transform_2, window_bounds = array<i64: 1, 96>}, {pipeline_mode = #tpu.pipeline_mode<synchronous>, transform_indices = @transform_3, window_bounds = array<i64: 32, 32>}, {pipeline_mode = #tpu.pipeline_mode<synchronous>, transform_indices = @transform_4, window_bounds = array<i64: 1, 32>}, {pipeline_mode = #tpu.pipeline_mode<synchronous>, transform_indices = @transform_5, window_bounds = array<i64: 1, 32>}, {pipeline_mode = #tpu.pipeline_mode<synchronous>, transform_indices = @transform_6, window_bounds = array<i64: 1, 32>}, {transform_indices = @transform_7, window_bounds = array<i64: 1, 8, 32>}]} {
    %c0 = arith.constant 0 : index
    %c0_0 = arith.constant 0 : index
    %c0_1 = arith.constant 0 : index
    %0 = vector.load %arg2[%c0, %c0_0, %c0_1] : memref<1x8x32xf32, #tpu.memory_space<vmem>>, vector<1x8x32xf32>
    %1 = vector.shape_cast %0 : vector<1x8x32xf32> to vector<8x32xf32>
    %2 = arith.truncf %1 : vector<8x32xf32> to vector<8x32xbf16>
    %c0_2 = arith.constant 0 : index
    %c0_3 = arith.constant 0 : index
    %3 = vector.load %arg3[%c0_2, %c0_3] : memref<32x96xbf16, #tpu.memory_space<vmem>>, vector<32x96xbf16>
    %cst = arith.constant dense<0.000000e+00> : vector<8x96xf32>
    %4 = tpu.matmul %2, %3, %cst {dimension_numbers = #tpu.dot_dimension_numbers<[1], [0], [0], [1], [0, 0, 1, 1], [], []>} : vector<8x32xbf16>, vector<32x96xbf16>, vector<8x96xf32> -> vector<8x96xf32>
    %c0_4 = arith.constant 0 : index
    %c0_5 = arith.constant 0 : index
    %5 = vector.load %arg4[%c0_4, %c0_5] : memref<1x96xf32, #tpu.memory_space<vmem>>, vector<1x96xf32>
    %6 = vector.broadcast %5 : vector<1x96xf32> to vector<8x96xf32>
    %7 = arith.addf %4, %6 : vector<8x96xf32>
    %8 = arith.index_cast %arg0 : i32 to index
    %9 = memref.load %arg1[%8] : memref<2xi32, #tpu.memory_space<smem>>
    %10 = tpu.iota {dimensions = array<i32: 0>} : vector<8x8xi32>
    %11 = tpu.iota {dimensions = array<i32: 1>} : vector<8x8xi32>
    %12 = arith.cmpi sle, %11, %10 : vector<8x8xi32>
    %13 = vector.broadcast %9 : i32 to vector<8x8xi32>
    %14 = arith.cmpi slt, %10, %13 : vector<8x8xi32>
    %15 = arith.andi %12, %14 : vector<8x8xi1>
    %16 = vector.broadcast %9 : i32 to vector<8x8xi32>
    %17 = arith.cmpi slt, %11, %16 : vector<8x8xi32>
    %18 = arith.andi %15, %17 : vector<8x8xi1>
    %19 = vector.extract_strided_slice %7 {offsets = [0, 0], sizes = [8, 32], strides = [1, 1]} : vector<8x96xf32> to vector<8x32xf32>
    %20 = vector.extract_strided_slice %7 {offsets = [0, 32], sizes = [8, 32], strides = [1, 1]} : vector<8x96xf32> to vector<8x32xf32>
    %21 = vector.extract_strided_slice %7 {offsets = [0, 64], sizes = [8, 32], strides = [1, 1]} : vector<8x96xf32> to vector<8x32xf32>
    %c0_6 = arith.constant 0 : index
    %c0_7 = arith.constant 0 : index
    %22 = vector.load %arg5[%c0_6, %c0_7] : memref<32x32xbf16, #tpu.memory_space<vmem>>, vector<32x32xbf16>
    %cst_8 = arith.constant 0.000000e+00 : f32
    %23 = vector.broadcast %cst_8 : f32 to vector<8x32xf32>
    %24 = vector.extract_strided_slice %19 {offsets = [0, 0], sizes = [8, 8], strides = [1, 1]} : vector<8x32xf32> to vector<8x8xf32>
    %cst_9 = arith.constant 0.353553385 : f32
    %25 = vector.broadcast %cst_9 : f32 to vector<8x8xf32>
    %26 = arith.mulf %24, %25 : vector<8x8xf32>
    %27 = arith.truncf %26 : vector<8x8xf32> to vector<8x8xbf16>
    %28 = vector.extract_strided_slice %20 {offsets = [0, 0], sizes = [8, 8], strides = [1, 1]} : vector<8x32xf32> to vector<8x8xf32>
    %29 = arith.truncf %28 : vector<8x8xf32> to vector<8x8xbf16>
    %30 = vector.extract_strided_slice %21 {offsets = [0, 0], sizes = [8, 8], strides = [1, 1]} : vector<8x32xf32> to vector<8x8xf32>
    %31 = arith.truncf %30 : vector<8x8xf32> to vector<8x8xbf16>
    %cst_10 = arith.constant dense<0.000000e+00> : vector<8x8xf32>
    %32 = tpu.matmul %27, %29, %cst_10 {dimension_numbers = #tpu.dot_dimension_numbers<[1], [1], [0], [0], [0, 0, 1, 0], [], []>} : vector<8x8xbf16>, vector<8x8xbf16>, vector<8x8xf32> -> vector<8x8xf32>
    %cst_11 = arith.constant -1.000000e+09 : f32
    %cst_12 = arith.constant 1.000000e+09 : f32
    %33 = vector.broadcast %cst_11 : f32 to vector<8x8xf32>
    %34 = arith.maximumf %33, %32 : vector<8x8xf32>
    %35 = vector.broadcast %cst_12 : f32 to vector<8x8xf32>
    %36 = arith.minimumf %35, %34 : vector<8x8xf32>
    %cst_13 = arith.constant -1.000000e+09 : f32
    %37 = vector.broadcast %cst_13 : f32 to vector<8x8xf32>
    %38 = arith.select %18, %36, %37 : vector<8x8xi1>, vector<8x8xf32>
    %cst_14 = arith.constant dense<0xFF800000> : vector<8xf32>
    %39 = vector.multi_reduction <maximumf>, %38, %cst_14 [1] : vector<8x8xf32> to vector<8xf32>
    %40 = vector.shape_cast %39 : vector<8xf32> to vector<8x1xf32>
    %41 = vector.broadcast %40 : vector<8x1xf32> to vector<8x8xf32>
    %42 = arith.subf %38, %41 : vector<8x8xf32>
    %43 = math.exp %42 : vector<8x8xf32>
    %cst_15 = arith.constant dense<0.000000e+00> : vector<8xf32>
    %44 = vector.multi_reduction <add>, %43, %cst_15 [1] : vector<8x8xf32> to vector<8xf32>
    %45 = vector.shape_cast %44 : vector<8xf32> to vector<8x1xf32>
    %46 = tpu.reciprocal %45 {approx = true} : vector<8x1xf32> -> vector<8x1xf32>
    %47 = vector.broadcast %46 : vector<8x1xf32> to vector<8x8xf32>
    %48 = arith.mulf %43, %47 : vector<8x8xf32>
    %49 = arith.truncf %48 : vector<8x8xf32> to vector<8x8xbf16>
    %cst_16 = arith.constant dense<0.000000e+00> : vector<8x8xf32>
    %50 = tpu.matmul %49, %31, %cst_16 {dimension_numbers = #tpu.dot_dimension_numbers<[1], [0], [0], [1], [0, 0, 1, 1], [], []>} : vector<8x8xbf16>, vector<8x8xbf16>, vector<8x8xf32> -> vector<8x8xf32>
    %51 = arith.truncf %50 : vector<8x8xf32> to vector<8x8xbf16>
    %52 = vector.extract_strided_slice %22 {offsets = [0, 0], sizes = [8, 32], strides = [1, 1]} : vector<32x32xbf16> to vector<8x32xbf16>
    %cst_17 = arith.constant dense<0.000000e+00> : vector<8x32xf32>
    %53 = tpu.matmul %51, %52, %cst_17 {dimension_numbers = #tpu.dot_dimension_numbers<[1], [0], [0], [1], [0, 0, 1, 1], [], []>} : vector<8x8xbf16>, vector<8x32xbf16>, vector<8x32xf32> -> vector<8x32xf32>
    %54 = arith.addf %23, %53 : vector<8x32xf32>
    %55 = vector.extract_strided_slice %19 {offsets = [0, 8], sizes = [8, 8], strides = [1, 1]} : vector<8x32xf32> to vector<8x8xf32>
    %cst_18 = arith.constant 0.353553385 : f32
    %56 = vector.broadcast %cst_18 : f32 to vector<8x8xf32>
    %57 = arith.mulf %55, %56 : vector<8x8xf32>
    %58 = arith.truncf %57 : vector<8x8xf32> to vector<8x8xbf16>
    %59 = vector.extract_strided_slice %20 {offsets = [0, 8], sizes = [8, 8], strides = [1, 1]} : vector<8x32xf32> to vector<8x8xf32>
    %60 = arith.truncf %59 : vector<8x8xf32> to vector<8x8xbf16>
    %61 = vector.extract_strided_slice %21 {offsets = [0, 8], sizes = [8, 8], strides = [1, 1]} : vector<8x32xf32> to vector<8x8xf32>
    %62 = arith.truncf %61 : vector<8x8xf32> to vector<8x8xbf16>
    %cst_19 = arith.constant dense<0.000000e+00> : vector<8x8xf32>
    %63 = tpu.matmul %58, %60, %cst_19 {dimension_numbers = #tpu.dot_dimension_numbers<[1], [1], [0], [0], [0, 0, 1, 0], [], []>} : vector<8x8xbf16>, vector<8x8xbf16>, vector<8x8xf32> -> vector<8x8xf32>
    %cst_20 = arith.constant -1.000000e+09 : f32
    %cst_21 = arith.constant 1.000000e+09 : f32
    %64 = vector.broadcast %cst_20 : f32 to vector<8x8xf32>
    %65 = arith.maximumf %64, %63 : vector<8x8xf32>
    %66 = vector.broadcast %cst_21 : f32 to vector<8x8xf32>
    %67 = arith.minimumf %66, %65 : vector<8x8xf32>
    %cst_22 = arith.constant -1.000000e+09 : f32
    %68 = vector.broadcast %cst_22 : f32 to vector<8x8xf32>
    %69 = arith.select %18, %67, %68 : vector<8x8xi1>, vector<8x8xf32>
    %cst_23 = arith.constant dense<0xFF800000> : vector<8xf32>
    %70 = vector.multi_reduction <maximumf>, %69, %cst_23 [1] : vector<8x8xf32> to vector<8xf32>
    %71 = vector.shape_cast %70 : vector<8xf32> to vector<8x1xf32>
    %72 = vector.broadcast %71 : vector<8x1xf32> to vector<8x8xf32>
    %73 = arith.subf %69, %72 : vector<8x8xf32>
    %74 = math.exp %73 : vector<8x8xf32>
    %cst_24 = arith.constant dense<0.000000e+00> : vector<8xf32>
    %75 = vector.multi_reduction <add>, %74, %cst_24 [1] : vector<8x8xf32> to vector<8xf32>
    %76 = vector.shape_cast %75 : vector<8xf32> to vector<8x1xf32>
    %77 = tpu.reciprocal %76 {approx = true} : vector<8x1xf32> -> vector<8x1xf32>
    %78 = vector.broadcast %77 : vector<8x1xf32> to vector<8x8xf32>
    %79 = arith.mulf %74, %78 : vector<8x8xf32>
    %80 = arith.truncf %79 : vector<8x8xf32> to vector<8x8xbf16>
    %cst_25 = arith.constant dense<0.000000e+00> : vector<8x8xf32>
    %81 = tpu.matmul %80, %62, %cst_25 {dimension_numbers = #tpu.dot_dimension_numbers<[1], [0], [0], [1], [0, 0, 1, 1], [], []>} : vector<8x8xbf16>, vector<8x8xbf16>, vector<8x8xf32> -> vector<8x8xf32>
    %82 = arith.truncf %81 : vector<8x8xf32> to vector<8x8xbf16>
    %83 = vector.extract_strided_slice %22 {offsets = [8, 0], sizes = [8, 32], strides = [1, 1]} : vector<32x32xbf16> to vector<8x32xbf16>
    %cst_26 = arith.constant dense<0.000000e+00> : vector<8x32xf32>
    %84 = tpu.matmul %82, %83, %cst_26 {dimension_numbers = #tpu.dot_dimension_numbers<[1], [0], [0], [1], [0, 0, 1, 1], [], []>} : vector<8x8xbf16>, vector<8x32xbf16>, vector<8x32xf32> -> vector<8x32xf32>
    %85 = arith.addf %54, %84 : vector<8x32xf32>
    %86 = vector.extract_strided_slice %19 {offsets = [0, 16], sizes = [8, 8], strides = [1, 1]} : vector<8x32xf32> to vector<8x8xf32>
    %cst_27 = arith.constant 0.353553385 : f32
    %87 = vector.broadcast %cst_27 : f32 to vector<8x8xf32>
    %88 = arith.mulf %86, %87 : vector<8x8xf32>
    %89 = arith.truncf %88 : vector<8x8xf32> to vector<8x8xbf16>
    %90 = vector.extract_strided_slice %20 {offsets = [0, 16], sizes = [8, 8], strides = [1, 1]} : vector<8x32xf32> to vector<8x8xf32>
    %91 = arith.truncf %90 : vector<8x8xf32> to vector<8x8xbf16>
    %92 = vector.extract_strided_slice %21 {offsets = [0, 16], sizes = [8, 8], strides = [1, 1]} : vector<8x32xf32> to vector<8x8xf32>
    %93 = arith.truncf %92 : vector<8x8xf32> to vector<8x8xbf16>
    %cst_28 = arith.constant dense<0.000000e+00> : vector<8x8xf32>
    %94 = tpu.matmul %89, %91, %cst_28 {dimension_numbers = #tpu.dot_dimension_numbers<[1], [1], [0], [0], [0, 0, 1, 0], [], []>} : vector<8x8xbf16>, vector<8x8xbf16>, vector<8x8xf32> -> vector<8x8xf32>
    %cst_29 = arith.constant -1.000000e+09 : f32
    %cst_30 = arith.constant 1.000000e+09 : f32
    %95 = vector.broadcast %cst_29 : f32 to vector<8x8xf32>
    %96 = arith.maximumf %95, %94 : vector<8x8xf32>
    %97 = vector.broadcast %cst_30 : f32 to vector<8x8xf32>
    %98 = arith.minimumf %97, %96 : vector<8x8xf32>
    %cst_31 = arith.constant -1.000000e+09 : f32
    %99 = vector.broadcast %cst_31 : f32 to vector<8x8xf32>
    %100 = arith.select %18, %98, %99 : vector<8x8xi1>, vector<8x8xf32>
    %cst_32 = arith.constant dense<0xFF800000> : vector<8xf32>
    %101 = vector.multi_reduction <maximumf>, %100, %cst_32 [1] : vector<8x8xf32> to vector<8xf32>
    %102 = vector.shape_cast %101 : vector<8xf32> to vector<8x1xf32>
    %103 = vector.broadcast %102 : vector<8x1xf32> to vector<8x8xf32>
    %104 = arith.subf %100, %103 : vector<8x8xf32>
    %105 = math.exp %104 : vector<8x8xf32>
    %cst_33 = arith.constant dense<0.000000e+00> : vector<8xf32>
    %106 = vector.multi_reduction <add>, %105, %cst_33 [1] : vector<8x8xf32> to vector<8xf32>
    %107 = vector.shape_cast %106 : vector<8xf32> to vector<8x1xf32>
    %108 = tpu.reciprocal %107 {approx = true} : vector<8x1xf32> -> vector<8x1xf32>
    %109 = vector.broadcast %108 : vector<8x1xf32> to vector<8x8xf32>
    %110 = arith.mulf %105, %109 : vector<8x8xf32>
    %111 = arith.truncf %110 : vector<8x8xf32> to vector<8x8xbf16>
    %cst_34 = arith.constant dense<0.000000e+00> : vector<8x8xf32>
    %112 = tpu.matmul %111, %93, %cst_34 {dimension_numbers = #tpu.dot_dimension_numbers<[1], [0], [0], [1], [0, 0, 1, 1], [], []>} : vector<8x8xbf16>, vector<8x8xbf16>, vector<8x8xf32> -> vector<8x8xf32>
    %113 = arith.truncf %112 : vector<8x8xf32> to vector<8x8xbf16>
    %114 = vector.extract_strided_slice %22 {offsets = [16, 0], sizes = [8, 32], strides = [1, 1]} : vector<32x32xbf16> to vector<8x32xbf16>
    %cst_35 = arith.constant dense<0.000000e+00> : vector<8x32xf32>
    %115 = tpu.matmul %113, %114, %cst_35 {dimension_numbers = #tpu.dot_dimension_numbers<[1], [0], [0], [1], [0, 0, 1, 1], [], []>} : vector<8x8xbf16>, vector<8x32xbf16>, vector<8x32xf32> -> vector<8x32xf32>
    %116 = arith.addf %85, %115 : vector<8x32xf32>
    %117 = vector.extract_strided_slice %19 {offsets = [0, 24], sizes = [8, 8], strides = [1, 1]} : vector<8x32xf32> to vector<8x8xf32>
    %cst_36 = arith.constant 0.353553385 : f32
    %118 = vector.broadcast %cst_36 : f32 to vector<8x8xf32>
    %119 = arith.mulf %117, %118 : vector<8x8xf32>
    %120 = arith.truncf %119 : vector<8x8xf32> to vector<8x8xbf16>
    %121 = vector.extract_strided_slice %20 {offsets = [0, 24], sizes = [8, 8], strides = [1, 1]} : vector<8x32xf32> to vector<8x8xf32>
    %122 = arith.truncf %121 : vector<8x8xf32> to vector<8x8xbf16>
    %123 = vector.extract_strided_slice %21 {offsets = [0, 24], sizes = [8, 8], strides = [1, 1]} : vector<8x32xf32> to vector<8x8xf32>
    %124 = arith.truncf %123 : vector<8x8xf32> to vector<8x8xbf16>
    %cst_37 = arith.constant dense<0.000000e+00> : vector<8x8xf32>
    %125 = tpu.matmul %120, %122, %cst_37 {dimension_numbers = #tpu.dot_dimension_numbers<[1], [1], [0], [0], [0, 0, 1, 0], [], []>} : vector<8x8xbf16>, vector<8x8xbf16>, vector<8x8xf32> -> vector<8x8xf32>
    %cst_38 = arith.constant -1.000000e+09 : f32
    %cst_39 = arith.constant 1.000000e+09 : f32
    %126 = vector.broadcast %cst_38 : f32 to vector<8x8xf32>
    %127 = arith.maximumf %126, %125 : vector<8x8xf32>
    %128 = vector.broadcast %cst_39 : f32 to vector<8x8xf32>
    %129 = arith.minimumf %128, %127 : vector<8x8xf32>
    %cst_40 = arith.constant -1.000000e+09 : f32
    %130 = vector.broadcast %cst_40 : f32 to vector<8x8xf32>
    %131 = arith.select %18, %129, %130 : vector<8x8xi1>, vector<8x8xf32>
    %cst_41 = arith.constant dense<0xFF800000> : vector<8xf32>
    %132 = vector.multi_reduction <maximumf>, %131, %cst_41 [1] : vector<8x8xf32> to vector<8xf32>
    %133 = vector.shape_cast %132 : vector<8xf32> to vector<8x1xf32>
    %134 = vector.broadcast %133 : vector<8x1xf32> to vector<8x8xf32>
    %135 = arith.subf %131, %134 : vector<8x8xf32>
    %136 = math.exp %135 : vector<8x8xf32>
    %cst_42 = arith.constant dense<0.000000e+00> : vector<8xf32>
    %137 = vector.multi_reduction <add>, %136, %cst_42 [1] : vector<8x8xf32> to vector<8xf32>
    %138 = vector.shape_cast %137 : vector<8xf32> to vector<8x1xf32>
    %139 = tpu.reciprocal %138 {approx = true} : vector<8x1xf32> -> vector<8x1xf32>
    %140 = vector.broadcast %139 : vector<8x1xf32> to vector<8x8xf32>
    %141 = arith.mulf %136, %140 : vector<8x8xf32>
    %142 = arith.truncf %141 : vector<8x8xf32> to vector<8x8xbf16>
    %cst_43 = arith.constant dense<0.000000e+00> : vector<8x8xf32>
    %143 = tpu.matmul %142, %124, %cst_43 {dimension_numbers = #tpu.dot_dimension_numbers<[1], [0], [0], [1], [0, 0, 1, 1], [], []>} : vector<8x8xbf16>, vector<8x8xbf16>, vector<8x8xf32> -> vector<8x8xf32>
    %144 = arith.truncf %143 : vector<8x8xf32> to vector<8x8xbf16>
    %145 = vector.extract_strided_slice %22 {offsets = [24, 0], sizes = [8, 32], strides = [1, 1]} : vector<32x32xbf16> to vector<8x32xbf16>
    %cst_44 = arith.constant dense<0.000000e+00> : vector<8x32xf32>
    %146 = tpu.matmul %144, %145, %cst_44 {dimension_numbers = #tpu.dot_dimension_numbers<[1], [0], [0], [1], [0, 0, 1, 1], [], []>} : vector<8x8xbf16>, vector<8x32xbf16>, vector<8x32xf32> -> vector<8x32xf32>
    %147 = arith.addf %116, %146 : vector<8x32xf32>
    %c0_45 = arith.constant 0 : index
    %c0_46 = arith.constant 0 : index
    %148 = vector.load %arg6[%c0_45, %c0_46] : memref<1x32xf32, #tpu.memory_space<vmem>>, vector<1x32xf32>
    %149 = vector.broadcast %148 : vector<1x32xf32> to vector<8x32xf32>
    %150 = arith.addf %147, %149 : vector<8x32xf32>
    %151 = arith.addf %1, %150 : vector<8x32xf32>
    %c0_47 = arith.constant 0 : index
    %c0_48 = arith.constant 0 : index
    %152 = vector.load %arg7[%c0_47, %c0_48] : memref<1x32xf32, #tpu.memory_space<vmem>>, vector<1x32xf32>
    %c0_49 = arith.constant 0 : index
    %c0_50 = arith.constant 0 : index
    %153 = vector.load %arg8[%c0_49, %c0_50] : memref<1x32xf32, #tpu.memory_space<vmem>>, vector<1x32xf32>
    %cst_51 = arith.constant dense<0.000000e+00> : vector<8xf32>
    %154 = vector.multi_reduction <add>, %151, %cst_51 [1] : vector<8x32xf32> to vector<8xf32>
    %155 = vector.shape_cast %154 : vector<8xf32> to vector<8x1xf32>
    %cst_52 = arith.constant 3.200000e+01 : f32
    %156 = vector.broadcast %cst_52 : f32 to vector<8x1xf32>
    %157 = arith.divf %155, %156 : vector<8x1xf32>
    %158 = vector.broadcast %157 : vector<8x1xf32> to vector<8x32xf32>
    %159 = arith.subf %151, %158 : vector<8x32xf32>
    %160 = arith.mulf %159, %159 : vector<8x32xf32>
    %cst_53 = arith.constant dense<0.000000e+00> : vector<8xf32>
    %161 = vector.multi_reduction <add>, %160, %cst_53 [1] : vector<8x32xf32> to vector<8xf32>
    %162 = vector.shape_cast %161 : vector<8xf32> to vector<8x1xf32>
    %cst_54 = arith.constant 3.200000e+01 : f32
    %163 = vector.broadcast %cst_54 : f32 to vector<8x1xf32>
    %164 = arith.divf %162, %163 : vector<8x1xf32>
    %165 = vector.broadcast %157 : vector<8x1xf32> to vector<8x32xf32>
    %166 = arith.subf %151, %165 : vector<8x32xf32>
    %cst_55 = arith.constant 9.99999974E-6 : f32
    %167 = vector.broadcast %cst_55 : f32 to vector<8x1xf32>
    %168 = arith.addf %164, %167 : vector<8x1xf32>
    %169 = math.rsqrt %168 : vector<8x1xf32>
    %170 = vector.broadcast %169 : vector<8x1xf32> to vector<8x32xf32>
    %171 = arith.mulf %166, %170 : vector<8x32xf32>
    %172 = vector.broadcast %152 : vector<1x32xf32> to vector<8x32xf32>
    %173 = arith.mulf %172, %171 : vector<8x32xf32>
    %174 = vector.broadcast %153 : vector<1x32xf32> to vector<8x32xf32>
    %175 = arith.addf %173, %174 : vector<8x32xf32>
    %c0_56 = arith.constant 0 : index
    %c0_57 = arith.constant 0 : index
    %c0_58 = arith.constant 0 : index
    %176 = vector.load %arg9[%c0_56, %c0_57, %c0_58] : memref<1x8x32xf32, #tpu.memory_space<vmem>>, vector<1x8x32xf32>
    %177 = vector.shape_cast %176 : vector<1x8x32xf32> to vector<8x32xf32>
    %178 = vector.shape_cast %175 : vector<8x32xf32> to vector<1x8x32xf32>
    tpu.vector_store %arg9[%c0_56, %c0_57, %c0_58], %178 {strides = array<i32>} : memref<1x8x32xf32, #tpu.memory_space<vmem>>, vector<1x8x32xf32>,
    return
  }
  func.func @transform_0(%arg0: i32, %arg1: memref<2xi32, #tpu.memory_space<smem>>) -> (i32, i32, i32) {
    %c0_i32 = arith.constant 0 : i32
    %c0_i32_0 = arith.constant 0 : i32
    %c0_i32_1 = arith.constant 0 : i32
    return %arg0, %c0_i32, %c0_i32_0 : i32, i32, i32
  }
  func.func @transform_1(%arg0: i32, %arg1: memref<2xi32, #tpu.memory_space<smem>>) -> (i32, i32) {
    %c0_i32 = arith.constant 0 : i32
    %c0_i32_0 = arith.constant 0 : i32
    %c0_i32_1 = arith.constant 0 : i32
    return %c0_i32, %c0_i32_0 : i32, i32
  }
  func.func @transform_2(%arg0: i32, %arg1: memref<2xi32, #tpu.memory_space<smem>>) -> (i32, i32) {
    %c0_i32 = arith.constant 0 : i32
    %c0_i32_0 = arith.constant 0 : i32
    %c0_i32_1 = arith.constant 0 : i32
    return %c0_i32, %c0_i32_0 : i32, i32
  }
  func.func @transform_3(%arg0: i32, %arg1: memref<2xi32, #tpu.memory_space<smem>>) -> (i32, i32) {
    %c0_i32 = arith.constant 0 : i32
    %c0_i32_0 = arith.constant 0 : i32
    %c0_i32_1 = arith.constant 0 : i32
    return %c0_i32, %c0_i32_0 : i32, i32
  }
  func.func @transform_4(%arg0: i32, %arg1: memref<2xi32, #tpu.memory_space<smem>>) -> (i32, i32) {
    %c0_i32 = arith.constant 0 : i32
    %c0_i32_0 = arith.constant 0 : i32
    %c0_i32_1 = arith.constant 0 : i32
    return %c0_i32, %c0_i32_0 : i32, i32
  }
  func.func @transform_5(%arg0: i32, %arg1: memref<2xi32, #tpu.memory_space<smem>>) -> (i32, i32) {
    %c0_i32 = arith.constant 0 : i32
    %c0_i32_0 = arith.constant 0 : i32
    %c0_i32_1 = arith.constant 0 : i32
    return %c0_i32, %c0_i32_0 : i32, i32
  }
  func.func @transform_6(%arg0: i32, %arg1: memref<2xi32, #tpu.memory_space<smem>>) -> (i32, i32) {
    %c0_i32 = arith.constant 0 : i32
    %c0_i32_0 = arith.constant 0 : i32
    %c0_i32_1 = arith.constant 0 : i32
    return %c0_i32, %c0_i32_0 : i32, i32
  }
  func.func @transform_7(%arg0: i32, %arg1: memref<2xi32, #tpu.memory_space<smem>>) -> (i32, i32, i32) {
    %c0_i32 = arith.constant 0 : i32
    %c0_i32_0 = arith.constant 0 : i32
    %c0_i32_1 = arith.constant 0 : i32
    return %arg0, %c0_i32, %c0_i32_0 : i32, i32, i32
  }
}

</mosaic_0001>

<llo_original>
// kernel: tpu_custom_call.1
$region0: #{tpu_custom_call.1}
  #allocation0 [shape = 'u32[]', space=smem, size = 0x4, offset = 0x4, fixed_abs, tag = 'smem constant byte address 0x4 - core index']
  #allocation1 [shape = 'u32[144,128]{1,0:T(1,128)}', space=vmem, size = 0x12000, scoped, tag = 'internal scratch']
  #allocation2 [shape = 's32[1]{0}', space=sflag, size = 0x4, scoped, tag = 'scoped memory for tpu_custom_call.1']
  #allocation3 [shape = 'u8[512]{0}', space=smem, size = 0x200, scoped, tag = 'prefetched SMEM operand 0']
  %s0 = inlined_call_operand.hbm [shape: s32[2], index: 0, kind: input, shape index: {}]
  %s1 = inlined_call_operand.hbm [shape: f32[2,8,32], index: 1, kind: input, shape index: {}]
  %s2 = inlined_call_operand.hbm [shape: bf16[32,96], index: 2, kind: input, shape index: {}]
  %s3 = inlined_call_operand.vmem [shape: f32[1,96], index: 3, kind: input, shape index: {}]
  %s4 = inlined_call_operand.hbm [shape: bf16[32,32], index: 4, kind: input, shape index: {}]
  %s5 = inlined_call_operand.vmem [shape: f32[1,32], index: 5, kind: input, shape index: {}]
  %s6 = inlined_call_operand.vmem [shape: f32[1,32], index: 6, kind: input, shape index: {}]
  %s7 = inlined_call_operand.vmem [shape: f32[1,32], index: 7, kind: input, shape index: {}]
  %s8 = inlined_call_operand.hbm [shape: f32[2,8,32], index: 8, kind: output, shape index: {}]
  %s9 = sld [smem:[#allocation0]]
  $region73: #{tpu_custom_call.1} parent=0
    _
  %s11 = ssub.s32 1, %s9
  %s12 = scalar_select 0, %s11, %s9
  %14 = dma.hbm_to_smem %s0, 16, [#allocation3], [#allocation2]
  %15 = dma.done [#allocation2], 16
  %16 = sfence
  $region1: #{tpu_custom_call.1} parent=0
    #allocation4 [shape = 'u8[8192]{0}', space=vmem, size = 0x2000, scoped, tag = 'input window, operand 1']
    #allocation5 [shape = 's32[2]{0}', space=sflag, size = 0x8, scoped, tag = 'scoped memory for tpu_custom_call.1']
    #allocation6 [shape = 's32[2]{0}', space=sflag, size = 0x8, scoped, tag = 'scoped memory for tpu_custom_call.1']
    #allocation7 [shape = 'u8[8192]{0}', space=vmem, size = 0x2000, scoped, tag = 'input window, operand 2, single buffered']
    #allocation8 [shape = 's32[1]{0}', space=sflag, size = 0x4, scoped, tag = 'scoped memory for tpu_custom_call.1']
    #allocation9 [shape = 'u8[8192]{0}', space=vmem, size = 0x2000, scoped, tag = 'input window, operand 4, single buffered']
    #allocation10 [shape = 'u8[8192]{0}', space=vmem, size = 0x2000, scoped, tag = 'output window, operand 0']
    %17 = vsyncpa [#allocation5], 0
    %s18 = scalar_lea.sflag [#allocation5], 1
    %19 = vsyncpa %s18, 0
    %20 = vsyncpa [#allocation8], 0
    %21 = vsyncpa [#allocation6], 0
    %s22 = scalar_lea.sflag [#allocation6], 1
    %23 = vsyncpa %s22, 0
    loop: start=0, step=1, limit=4
    $region2: #{tpu_custom_call.1} parent=1 // loop_pre_header
      _
    $region3: #{tpu_custom_call.1} parent=1 // loop_header
      %s25 = sphi 0, %s29
      %p26 = scmp.ge.s32.totalorder %s25, 4
      %s35 = sphi 0, %s37
      %s38 = sphi 0, %s35
      %s39 = sphi 0, %s38
      %s55 = sphi 0, %s39
      %s59 = sphi 0, %s59
      %s61 = sphi 0, %s59
      %s62 = sphi 0, %s61
      %s76 = sphi 0, %s62
      %s80 = sphi 0, %s80
      %s82 = sphi 0, %s80
      %s83 = sphi 0, %s82
      %s97 = sphi 0, %s83
      %s101 = sphi 0, %s101
      %s103 = sphi 0, %s101
      %s104 = sphi 0, %s103
      %s118 = sphi 0, %s104
      %s122 = sphi 0, %s122
      %s124 = sphi 0, %s122
      %s125 = sphi 0, %s124
      %s139 = sphi 0, %s125
      %s143 = sphi 0, %s143
      %s145 = sphi 0, %s143
      %s146 = sphi 0, %s145
      %s160 = sphi 0, %s146
      %s164 = sphi 0, %s164
      %s166 = sphi 0, %s164
      %s167 = sphi 0, %s166
      %s181 = sphi 0, %s167
      %s187 = sphi 0, %s189
      %s190 = sphi 0, %s187
      %s191 = sphi 0, %s190
      %s207 = sphi 0, %s191
    $region4: #{tpu_custom_call.1} parent=1 // loop_header_branch
      %28 = sbr.rel (%p26) target = $region8
    $region5: #{tpu_custom_call.1} parent=1 // loop_body
      %s30 = ssub.s32 %s25, 1
      %s31 = ssub.s32 %s25, 2
      %s32 = sadd.s32 %s25, 1
      %s33 = ssub.s32 %s25, %s32
      %p34 = scmp.eq.s32.totalorder %s33, 0
      %s36 = sadd.s32 %s35, 1
      %s37 = scalar_select %p34, %s35, %s36
      %p40 = pneg %p34
      %p41 = scmp.eq.s32.totalorder %s25, 1
      %p42 = por %p40, %p41
      %p43 = scmp.ne.s32.totalorder %s35, %s38
      %p44 = scmp.eq.s32.totalorder %s25, 0
      %p45 = por %p43, %p44
      %p46 = scmp.ne.s32.totalorder %s35, %s38
      %p47 = scmp.eq.s32.totalorder %s30, 1
      %p48 = por %p46, %p47
      %p49 = scmp.ne.s32.totalorder %s38, %s39
      %p50 = scmp.eq.s32.totalorder %s30, 0
      %p51 = por %p49, %p50
      %p52 = scmp.ne.s32.totalorder %s38, %s39
      %p53 = scmp.eq.s32.totalorder %s31, 1
      %p54 = por %p52, %p53
      %p56 = scmp.ne.s32.totalorder %s39, %s55
      %p57 = scmp.eq.s32.totalorder %s31, 0
      %p58 = por %p56, %p57
      %s60 = sadd.s32 %s59, 1
      %p63 = scmp.eq.s32.totalorder %s25, 1
      %p64 = scmp.ne.s32.totalorder %s59, %s61
      %p65 = scmp.eq.s32.totalorder %s25, 0
      %p66 = por %p64, %p65
      %p67 = scmp.ne.s32.totalorder %s59, %s61
      %p68 = scmp.eq.s32.totalorder %s30, 1
      %p69 = por %p67, %p68
      %p70 = scmp.ne.s32.totalorder %s61, %s62
      %p71 = scmp.eq.s32.totalorder %s30, 0
      %p72 = por %p70, %p71
      %p73 = scmp.ne.s32.totalorder %s61, %s62
      %p74 = scmp.eq.s32.totalorder %s31, 1
      %p75 = por %p73, %p74
      %p77 = scmp.ne.s32.totalorder %s62, %s76
      %p78 = scmp.eq.s32.totalorder %s31, 0
      %p79 = por %p77, %p78
      %s81 = sadd.s32 %s80, 1
      %p84 = scmp.eq.s32.totalorder %s25, 1
      %p85 = scmp.ne.s32.totalorder %s80, %s82
      %p86 = scmp.eq.s32.totalorder %s25, 0
      %p87 = por %p85, %p86
      %p88 = scmp.ne.s32.totalorder %s80, %s82
      %p89 = scmp.eq.s32.totalorder %s30, 1
      %p90 = por %p88, %p89
      %p91 = scmp.ne.s32.totalorder %s82, %s83
      %p92 = scmp.eq.s32.totalorder %s30, 0
      %p93 = por %p91, %p92
      %p94 = scmp.ne.s32.totalorder %s82, %s83
      %p95 = scmp.eq.s32.totalorder %s31, 1
      %p96 = por %p94, %p95
      %p98 = scmp.ne.s32.totalorder %s83, %s97
      %p99 = scmp.eq.s32.totalorder %s31, 0
      %p100 = por %p98, %p99
      %s102 = sadd.s32 %s101, 1
      %p105 = scmp.eq.s32.totalorder %s25, 1
      %p106 = scmp.ne.s32.totalorder %s101, %s103
      %p107 = scmp.eq.s32.totalorder %s25, 0
      %p108 = por %p106, %p107
      %p109 = scmp.ne.s32.totalorder %s101, %s103
      %p110 = scmp.eq.s32.totalorder %s30, 1
      %p111 = por %p109, %p110
      %p112 = scmp.ne.s32.totalorder %s103, %s104
      %p113 = scmp.eq.s32.totalorder %s30, 0
      %p114 = por %p112, %p113
      %p115 = scmp.ne.s32.totalorder %s103, %s104
      %p116 = scmp.eq.s32.totalorder %s31, 1
      %p117 = por %p115, %p116
      %p119 = scmp.ne.s32.totalorder %s104, %s118
      %p120 = scmp.eq.s32.totalorder %s31, 0
      %p121 = por %p119, %p120
      %s123 = sadd.s32 %s122, 1
      %p126 = scmp.eq.s32.totalorder %s25, 1
      %p127 = scmp.ne.s32.totalorder %s122, %s124
      %p128 = scmp.eq.s32.totalorder %s25, 0
      %p129 = por %p127, %p128
      %p130 = scmp.ne.s32.totalorder %s122, %s124
      %p131 = scmp.eq.s32.totalorder %s30, 1
      %p132 = por %p130, %p131
      %p133 = scmp.ne.s32.totalorder %s124, %s125
      %p134 = scmp.eq.s32.totalorder %s30, 0
      %p135 = por %p133, %p134
      %p136 = scmp.ne.s32.totalorder %s124, %s125
      %p137 = scmp.eq.s32.totalorder %s31, 1
      %p138 = por %p136, %p137
      %p140 = scmp.ne.s32.totalorder %s125, %s139
      %p141 = scmp.eq.s32.totalorder %s31, 0
      %p142 = por %p140, %p141
      %s144 = sadd.s32 %s143, 1
      %p147 = scmp.eq.s32.totalorder %s25, 1
      %p148 = scmp.ne.s32.totalorder %s143, %s145
      %p149 = scmp.eq.s32.totalorder %s25, 0
      %p150 = por %p148, %p149
      %p151 = scmp.ne.s32.totalorder %s143, %s145
      %p152 = scmp.eq.s32.totalorder %s30, 1
      %p153 = por %p151, %p152
      %p154 = scmp.ne.s32.totalorder %s145, %s146
      %p155 = scmp.eq.s32.totalorder %s30, 0
      %p156 = por %p154, %p155
      %p157 = scmp.ne.s32.totalorder %s145, %s146
      %p158 = scmp.eq.s32.totalorder %s31, 1
      %p159 = por %p157, %p158
      %p161 = scmp.ne.s32.totalorder %s146, %s160
      %p162 = scmp.eq.s32.totalorder %s31, 0
      %p163 = por %p161, %p162
      %s165 = sadd.s32 %s164, 1
      %p168 = scmp.eq.s32.totalorder %s25, 1
      %p169 = scmp.ne.s32.totalorder %s164, %s166
      %p170 = scmp.eq.s32.totalorder %s25, 0
      %p171 = por %p169, %p170
      %p172 = scmp.ne.s32.totalorder %s164, %s166
      %p173 = scmp.eq.s32.totalorder %s30, 1
      %p174 = por %p172, %p173
      %p175 = scmp.ne.s32.totalorder %s166, %s167
      %p176 = scmp.eq.s32.totalorder %s30, 0
      %p177 = por %p175, %p176
      %p178 = scmp.ne.s32.totalorder %s166, %s167
      %p179 = scmp.eq.s32.totalorder %s31, 1
      %p180 = por %p178, %p179
      %p182 = scmp.ne.s32.totalorder %s167, %s181
      %p183 = scmp.eq.s32.totalorder %s31, 0
      %p184 = por %p182, %p183
      %s185 = ssub.s32 %s25, %s32
      %p186 = scmp.eq.s32.totalorder %s185, 0
      %s188 = sadd.s32 %s187, 1
      %s189 = scalar_select %p186, %s187, %s188
      %p192 = pneg %p186
      %p193 = scmp.eq.s32.totalorder %s25, 1
      %p194 = por %p192, %p193
      %p195 = scmp.ne.s32.totalorder %s187, %s190
      %p196 = scmp.eq.s32.totalorder %s25, 0
      %p197 = por %p195, %p196
      %p198 = scmp.ne.s32.totalorder %s187, %s190
      %p199 = scmp.eq.s32.totalorder %s30, 1
      %p200 = por %p198, %p199
      %p201 = scmp.ne.s32.totalorder %s190, %s191
      %p202 = scmp.eq.s32.totalorder %s30, 0
      %p203 = por %p201, %p202
      %p204 = scmp.ne.s32.totalorder %s190, %s191
      %p205 = scmp.eq.s32.totalorder %s31, 1
      %p206 = por %p204, %p205
      %p208 = scmp.ne.s32.totalorder %s191, %s207
      %p209 = scmp.eq.s32.totalorder %s31, 0
      %p210 = por %p208, %p209
      %p211 = scmp.le.s32.totalorder 1, %s25
      %p212 = scmp.lt.s32.totalorder %s25, 3
      %p213 = pnand %p211, %p212
      %p214 = pneg %p213
      // Predicated region
      $region9: #{tpu_custom_call.1} parent=5 // pred_check
        _
      $region10: #{tpu_custom_call.1} parent=5 // pred_check_branch
        %216 = sbr.rel (%p213) target = $region12
      $region11: #{tpu_custom_call.1} parent=5 // pred_region
        %s217 = ssub.s32 %s25, 1
        // Predicated region
        $region13: #{tpu_custom_call.1} parent=11 // pred_check
          %p218 = pneg %p72
        $region14: #{tpu_custom_call.1} parent=11 // pred_check_branch
          %220 = sbr.rel (%p218) target = $region16
        $region15: #{tpu_custom_call.1} parent=11 // pred_region
          %s222 = ssub.s32 256, 256
          %223 = vsyncadd [#allocation8], %s222
          %s224 = sshll.u32 [#allocation7], 4
          %s225 = int_to_ptr.vmem [resolvable:$true] %s224
          %230 = dma.hbm_to_vmem [thread:$0]  %s2, 256, %s225, [#allocation8], 64, 64, 4
        $region16: #{tpu_custom_call.1} parent=11 // pred_fallthru
          _
        // Predicated region
        $region17: #{tpu_custom_call.1} parent=11 // pred_check
          %p231 = pneg %p93
        $region18: #{tpu_custom_call.1} parent=11 // pred_check_branch
          %233 = sbr.rel (%p231) target = $region20
        $region19: #{tpu_custom_call.1} parent=11 // pred_region
          _
        $region20: #{tpu_custom_call.1} parent=11 // pred_fallthru
          _
        // Predicated region
        $region21: #{tpu_custom_call.1} parent=11 // pred_check
          %p234 = pneg %p114
        $region22: #{tpu_custom_call.1} parent=11 // pred_check_branch
          %236 = sbr.rel (%p234) target = $region24
        $region23: #{tpu_custom_call.1} parent=11 // pred_region
          %s238 = ssub.s32 256, 256
          %239 = vsyncadd [#allocation8], %s238
          %s240 = sshll.u32 [#allocation9], 4
          %s241 = int_to_ptr.vmem [resolvable:$true] %s240
          %246 = dma.hbm_to_vmem [thread:$0]  %s4, 256, %s241, [#allocation8], 64, 64, 4
        $region24: #{tpu_custom_call.1} parent=11 // pred_fallthru
          _
        // Predicated region
        $region25: #{tpu_custom_call.1} parent=11 // pred_check
          %p247 = pneg %p135
        $region26: #{tpu_custom_call.1} parent=11 // pred_check_branch
          %249 = sbr.rel (%p247) target = $region28
        $region27: #{tpu_custom_call.1} parent=11 // pred_region
          _
        $region28: #{tpu_custom_call.1} parent=11 // pred_fallthru
          _
        // Predicated region
        $region29: #{tpu_custom_call.1} parent=11 // pred_check
          %p250 = pneg %p156
        $region30: #{tpu_custom_call.1} parent=11 // pred_check_branch
          %252 = sbr.rel (%p250) target = $region32
        $region31: #{tpu_custom_call.1} parent=11 // pred_region
          _
        $region32: #{tpu_custom_call.1} parent=11 // pred_fallthru
          _
        // Predicated region
        $region33: #{tpu_custom_call.1} parent=11 // pred_check
          %p253 = pneg %p177
        $region34: #{tpu_custom_call.1} parent=11 // pred_check_branch
          %255 = sbr.rel (%p253) target = $region36
        $region35: #{tpu_custom_call.1} parent=11 // pred_region
          _
        $region36: #{tpu_custom_call.1} parent=11 // pred_fallthru
          _
      $region12: #{tpu_custom_call.1} parent=5 // pred_fallthru
        _
      %p256 = scmp.lt.s32.totalorder %s25, 2
      // Predicated region
      $region37: #{tpu_custom_call.1} parent=5 // pred_check
        %p257 = pneg %p256
      $region38: #{tpu_custom_call.1} parent=5 // pred_check_branch
        %259 = sbr.rel (%p257) target = $region40
      $region39: #{tpu_custom_call.1} parent=5 // pred_region
        // Predicated region
        $region41: #{tpu_custom_call.1} parent=39 // pred_check
          %p260 = pneg %p45
        $region42: #{tpu_custom_call.1} parent=39 // pred_check_branch
          %262 = sbr.rel (%p260) target = $region44
        $region43: #{tpu_custom_call.1} parent=39 // pred_region
          %s263 = sand.u32 %s35, 1
          %s264 = scalar_lea.sflag [#allocation5], %s263
          %s265 = sand.u32 %s35, 1
          %s266 = smul.addr %s265, 8
          %s267 = scalar_lea.vmem [#allocation4], %s266
          %s269 = ssub.s32 128, 128
          %270 = vsyncadd %s264, %s269
          %s271 = smul.addr %s25, 128
          %s272 = scalar_lea.hbm %s1, %s271
          %s274 = sshll.u32 %s267, 4
          %s275 = int_to_ptr.vmem [resolvable:$true] %s274
          %277 = dma.hbm_to_vmem [thread:$0]  %s272, 128, %s275, %s264
        $region44: #{tpu_custom_call.1} parent=39 // pred_fallthru
          _
      $region40: #{tpu_custom_call.1} parent=5 // pred_fallthru
        _
      %p278 = scmp.le.s32.totalorder 1, %s25
      %p279 = scmp.lt.s32.totalorder %s25, 3
      %p280 = pnand %p278, %p279
      %p281 = pneg %p280
      // Predicated region
      $region45: #{tpu_custom_call.1} parent=5 // pred_check
        _
      $region46: #{tpu_custom_call.1} parent=5 // pred_check_branch
        %283 = sbr.rel (%p280) target = $region48
      $region47: #{tpu_custom_call.1} parent=5 // pred_region
        %s284 = ssub.s32 %s25, 1
        %s285 = sand.u32 %s38, 1
        %s286 = scalar_lea.sflag [#allocation5], %s285
        %s287 = sand.u32 %s38, 1
        %s288 = smul.addr %s287, 8
        %s289 = scalar_lea.vmem [#allocation4], %s288
        // Predicated region
        $region49: #{tpu_custom_call.1} parent=47 // pred_check
          %p290 = pneg %p51
        $region50: #{tpu_custom_call.1} parent=47 // pred_check_branch
          %292 = sbr.rel (%p290) target = $region52
        $region51: #{tpu_custom_call.1} parent=47 // pred_region
          %293 = dma.done %s286, 128
        $region52: #{tpu_custom_call.1} parent=47 // pred_fallthru
          _
        // Predicated region
        $region53: #{tpu_custom_call.1} parent=47 // pred_check
          %p294 = pneg %p72
        $region54: #{tpu_custom_call.1} parent=47 // pred_check_branch
          %296 = sbr.rel (%p294) target = $region56
        $region55: #{tpu_custom_call.1} parent=47 // pred_region
          %297 = dma.done [#allocation8], 256
        $region56: #{tpu_custom_call.1} parent=47 // pred_fallthru
          _
        // Predicated region
        $region57: #{tpu_custom_call.1} parent=47 // pred_check
          %p298 = pneg %p114
        $region58: #{tpu_custom_call.1} parent=47 // pred_check_branch
          %300 = sbr.rel (%p298) target = $region60
        $region59: #{tpu_custom_call.1} parent=47 // pred_region
          %301 = dma.done [#allocation8], 256
        $region60: #{tpu_custom_call.1} parent=47 // pred_fallthru
          _
        %s302 = sand.u32 %s38, 1
        %s303 = scalar_lea.sflag [#allocation5], %s302
        %s304 = sand.u32 %s38, 1
        %s305 = smul.addr %s304, 8
        %s306 = scalar_lea.vmem [#allocation4], %s305
        %p307 = pneg %p51
        %p308 = pneg %p48
        %p309 = pneg %p72
        %p310 = pneg %p69
        %p311 = pneg %p93
        %p312 = pneg %p90
        %p313 = pneg %p114
        %p314 = pneg %p111
        %p315 = pneg %p135
        %p316 = pneg %p132
        %p317 = pneg %p156
        %p318 = pneg %p153
        %p319 = pneg %p177
        %p320 = pneg %p174
        %p321 = pneg %p203
        %p322 = pneg %p200
        %s323 = sand.u32 %s190, 1
        %s324 = scalar_lea.sflag [#allocation6], %s323
        %s325 = sand.u32 %s190, 1
        %s326 = smul.addr %s325, 8
        %s327 = scalar_lea.vmem [#allocation10], %s326
        %v329 = vld [vmem:[%s289] sm:$0xff]
        %v330 = vpack.c.bf16 %v329, %v329
        %v331 = vld [vmem:[#allocation7] sm:$0xf]
        %v332 = vld [vmem:[#allocation7 + $0x4] sm:$0xf]
        %v333 = vld [vmem:[#allocation7 + $0x8] sm:$0xf]
        %v334 = vld [vmem:[#allocation7 + $0xc] sm:$0xf]
        %v335 = vld [vmem:[%s3] sm:$0x1]
        %v337 = vlaneseq
        %v338 = vshrl.u32 %v337, 7
        %v339 = vsub.s32 0, %v338
        %v340 = vrot.slane %v335, %v339
        %v346 = vunpack.c.l.b16 %v331
        %v347 = vunpack.c.l.b16 %v332
        %v348 = vunpack.c.l.b16 %v333
        %v349 = vunpack.c.l.b16 %v334
        %v350 = vpack.c.b16 %v347, %v346
        %v351 = vpack.c.b16 %v349, %v348
        %vm354 = vcmask 261120
        %v356 = vsel %vm354, %v330, 0
        %358 = vmatprep.subr.bf16.mxu0 0
        %359 = vmatpush1.bf16.msra.mxu0 0
        %360 = vmatprep.subr.bf16.mxu0 0
        %361 = vmatpush1.bf16.msra.mxu0 0
        %362 = vmatprep.subr.bf16.mxu0 0
        %363 = vmatpush1.bf16.msra.mxu0 0
        %364 = vmatprep.subr.bf16.mxu0 0
        %365 = vmatpush1.bf16.msra.mxu0 0
        %366 = vmatprep.subr.bf16.mxu0 0
        %367 = vmatpush1.bf16.msra.mxu0 0
        %368 = vmatprep.subr.bf16.mxu0 0
        %369 = vmatpush1.bf16.msra.mxu0 0
        %370 = vmatprep.subr.bf16.mxu0 0
        %371 = vmatpush1.bf16.msra.mxu0 %v351
        %372 = vmatprep.subr.bf16.mxu0 0
        %373 = vmatpush1.bf16.msra.mxu0 %v350
        %374 = vmatprep.subr.bf16.mxu0 0
        %375 = vmatpush2.bf16.msra.mxu0 0
        %376 = vmatprep.subr.bf16.mxu0 0
        %377 = vmatpush2.bf16.msra.mxu0 0
        %378 = vmatprep.subr.bf16.mxu0 0
        %379 = vmatpush2.bf16.msra.mxu0 0
        %380 = vmatprep.subr.bf16.mxu0 0
        %381 = vmatpush2.bf16.msra.mxu0 0
        %382 = vmatprep.subr.bf16.mxu0 0
        %383 = vmatpush2.bf16.msra.mxu0 0
        %384 = vmatprep.subr.bf16.mxu0 0
        %385 = vmatpush2.bf16.msra.mxu0 0
        %386 = vmatprep.subr.bf16.mxu0 0
        %387 = vmatpush2.bf16.msra.mxu0 0
        %388 = vmatprep.subr.bf16.mxu0 0
        %389 = vmatpush2.bf16.msra.mxu0 0
        %390 = vmatprep.mubr.bf16.mxu0 0
        %391 = vmatmul.mubr.bf16.gmra.mxu0 %v356
        %v392 = vpop.f32.mrf.mxu0
        %v393 = vadd.f32 %v340, %v392
        %v394 = vpop.f32.mrf.mxu0
        %v395 = vpop.f32.mrf.mxu0
        %v396 = vpop.f32.mrf.mxu0
        %397 = vdwg.mxu0
        %s398 = sld [smem:[#allocation3 + %s30]]
        %v399 = vlaneseq
        %v400 = vshrl.u32 %v399, 7
        %v401 = vlaneseq
        %v402 = vand.u32 %v401, 127
        %vm403 = vcmp.le.s32.totalorder %v402, %v400
        %v404 = vstv %s398
        %vm405 = vcmp.lt.s32.totalorder %v400, %v404
        %vm406 = vmand %vm403, %vm405
        %vm407 = vcmp.lt.s32.totalorder %v402, %v404
        %vm408 = vmand %vm406, %vm407
        %v409 = vld [vmem:[#allocation9] sm:$0xf]
        %v410 = vld [vmem:[#allocation9 + $0x4] sm:$0xf]
        %v411 = vld [vmem:[#allocation9 + $0x8] sm:$0xf]
        %v412 = vld [vmem:[#allocation9 + $0xc] sm:$0xf]
        %v413 = vmul.f32 %v393, 0.35355338
        %v414 = vpack.c.bf16 %v413, %v413
        %v415 = vpack.c.bf16 %v393, %v393
        %417 = vrot.lane.b32.xlu0 %v415, 96
        %v418 = vpop.permute.xlu0 %417
        %vm419 = vcmask 64512
        %v421 = vsel %vm419, %v414, 0
        %v424 = vsel %vm419, %v418, 0
        %426 = vmatprep.subr.bf16.mxu0 0
        %427 = vmatpush1.bf16.xpose.msra.mxu0 0
        %428 = vmatprep.subr.bf16.mxu0 0
        %429 = vmatpush1.bf16.xpose.msra.mxu0 0
        %430 = vmatprep.subr.bf16.mxu0 0
        %431 = vmatpush1.bf16.xpose.msra.mxu0 0
        %432 = vmatprep.subr.bf16.mxu0 0
        %433 = vmatpush1.bf16.xpose.msra.mxu0 0
        %434 = vmatprep.subr.bf16.mxu0 0
        %435 = vmatpush1.bf16.xpose.msra.mxu0 0
        %436 = vmatprep.subr.bf16.mxu0 0
        %437 = vmatpush1.bf16.xpose.msra.mxu0 0
        %438 = vmatprep.subr.bf16.mxu0 0
        %439 = vmatpush1.bf16.xpose.msra.mxu0 0
        %440 = vmatprep.subr.bf16.mxu0 0
        %441 = vmatpush1.bf16.xpose.msra.mxu0 %v424
        %442 = vmatprep.subr.bf16.mxu0 0
        %443 = vmatpush2.bf16.xpose.msra.mxu0 0
        %444 = vmatprep.subr.bf16.mxu0 0
        %445 = vmatpush2.bf16.xpose.msra.mxu0 0
        %446 = vmatprep.subr.bf16.mxu0 0
        %447 = vmatpush2.bf16.xpose.msra.mxu0 0
        %448 = vmatprep.subr.bf16.mxu0 0
        %449 = vmatpush2.bf16.xpose.msra.mxu0 0
        %450 = vmatprep.subr.bf16.mxu0 0
        %451 = vmatpush2.bf16.xpose.msra.mxu0 0
        %452 = vmatprep.subr.bf16.mxu0 0
        %453 = vmatpush2.bf16.xpose.msra.mxu0 0
        %454 = vmatprep.subr.bf16.mxu0 0
        %455 = vmatpush2.bf16.xpose.msra.mxu0 0
        %456 = vmatprep.subr.bf16.mxu0 0
        %457 = vmatpush2.bf16.xpose.msra.mxu0 0
        %458 = vmatprep.mubr.bf16.mxu0 0
        %459 = vmatmul.mubr.bf16.gmra.mxu0 %v421
        %v460 = vpop.f32.mrf.mxu0
        %v461 = vadd.f32 0.0, %v460
        %v462 = vpop.f32.mrf.mxu0
        %v463 = vpop.f32.mrf.mxu0
        %v464 = vpop.f32.mrf.mxu0
        %465 = vdwg.mxu0
        %v466 = vmax.f32 %v461, -1e+09
        %v467 = vmin.f32 %v466, 1e+09
        %v468 = vsel %vm408, %v467, -1e+09
        %v469 = vsel %vm419, %v468, -inf
        %470 = vmax.xlane.f32.xlu0 %v469
        %v471 = vpop.xlane.xlu0 %470
        %v472 = vsub.f32 %v468, %v471
        %v473 = vmul.f32 %v472, 1.442695
        %v474 = vpow.pop %v473
        %v475 = vsel %vm419, %v474, 0.0
        %476 = vadd.xlane.f32.xlu0 %v475
        %v477 = vpop.xlane.xlu0 %476
        %v478 = vrcp.pop %v477
        %v479 = vmul.f32 %v474, %v478
        %v480 = vpack.c.bf16 %v479, %v479
        %481 = vrot.lane.b32.xlu0 %v415, 64
        %v482 = vpop.permute.xlu0 %481
        %v484 = vsel %vm419, %v480, 0
        %vm486 = vcmask 1043456
        %v488 = vsel %vm486, %v482, 0
        %490 = vmatprep.subr.bf16.mxu0 0
        %491 = vmatpush1.bf16.msra.mxu0 0
        %492 = vmatprep.subr.bf16.mxu0 0
        %493 = vmatpush1.bf16.msra.mxu0 0
        %494 = vmatprep.subr.bf16.mxu0 0
        %495 = vmatpush1.bf16.msra.mxu0 0
        %496 = vmatprep.subr.bf16.mxu0 0
        %497 = vmatpush1.bf16.msra.mxu0 0
        %498 = vmatprep.subr.bf16.mxu0 0
        %499 = vmatpush1.bf16.msra.mxu0 0
        %500 = vmatprep.subr.bf16.mxu0 0
        %501 = vmatpush1.bf16.msra.mxu0 0
        %502 = vmatprep.subr.bf16.mxu0 0
        %503 = vmatpush1.bf16.msra.mxu0 0
        %504 = vmatprep.subr.bf16.mxu0 0
        %505 = vmatpush1.bf16.msra.mxu0 %v488
        %506 = vmatprep.subr.bf16.mxu0 0
        %507 = vmatpush2.bf16.msra.mxu0 0
        %508 = vmatprep.subr.bf16.mxu0 0
        %509 = vmatpush2.bf16.msra.mxu0 0
        %510 = vmatprep.subr.bf16.mxu0 0
        %511 = vmatpush2.bf16.msra.mxu0 0
        %512 = vmatprep.subr.bf16.mxu0 0
        %513 = vmatpush2.bf16.msra.mxu0 0
        %514 = vmatprep.subr.bf16.mxu0 0
        %515 = vmatpush2.bf16.msra.mxu0 0
        %516 = vmatprep.subr.bf16.mxu0 0
        %517 = vmatpush2.bf16.msra.mxu0 0
        %518 = vmatprep.subr.bf16.mxu0 0
        %519 = vmatpush2.bf16.msra.mxu0 0
        %520 = vmatprep.subr.bf16.mxu0 0
        %521 = vmatpush2.bf16.msra.mxu0 0
        %522 = vmatprep.mubr.bf16.mxu0 0
        %523 = vmatmul.mubr.bf16.gmra.mxu0 %v484
        %v524 = vpop.f32.mrf.mxu0
        %v525 = vadd.f32 0.0, %v524
        %v526 = vpop.f32.mrf.mxu0
        %v527 = vpop.f32.mrf.mxu0
        %v528 = vpop.f32.mrf.mxu0
        %529 = vdwg.mxu0
        %v530 = vpack.c.bf16 %v525, %v525
        %532 = vrot.lane.b32.xlu0 %v414, 120
        %v533 = vpop.permute.xlu0 %532
        %534 = vrot.lane.b32.xlu0 %v415, 88
        %v535 = vpop.permute.xlu0 %534
        %v537 = vsel %vm419, %v533, 0
        %v540 = vsel %vm419, %v535, 0
        %542 = vmatprep.subr.bf16.mxu0 0
        %543 = vmatpush1.bf16.xpose.msra.mxu0 0
        %544 = vmatprep.subr.bf16.mxu0 0
        %545 = vmatpush1.bf16.xpose.msra.mxu0 0
        %546 = vmatprep.subr.bf16.mxu0 0
        %547 = vmatpush1.bf16.xpose.msra.mxu0 0
        %548 = vmatprep.subr.bf16.mxu0 0
        %549 = vmatpush1.bf16.xpose.msra.mxu0 0
        %550 = vmatprep.subr.bf16.mxu0 0
        %551 = vmatpush1.bf16.xpose.msra.mxu0 0
        %552 = vmatprep.subr.bf16.mxu0 0
        %553 = vmatpush1.bf16.xpose.msra.mxu0 0
        %554 = vmatprep.subr.bf16.mxu0 0
        %555 = vmatpush1.bf16.xpose.msra.mxu0 0
        %556 = vmatprep.subr.bf16.mxu0 0
        %557 = vmatpush1.bf16.xpose.msra.mxu0 %v540
        %558 = vmatprep.subr.bf16.mxu0 0
        %559 = vmatpush2.bf16.xpose.msra.mxu0 0
        %560 = vmatprep.subr.bf16.mxu0 0
        %561 = vmatpush2.bf16.xpose.msra.mxu0 0
        %562 = vmatprep.subr.bf16.mxu0 0
        %563 = vmatpush2.bf16.xpose.msra.mxu0 0
        %564 = vmatprep.subr.bf16.mxu0 0
        %565 = vmatpush2.bf16.xpose.msra.mxu0 0
        %566 = vmatprep.subr.bf16.mxu0 0
        %567 = vmatpush2.bf16.xpose.msra.mxu0 0
        %568 = vmatprep.subr.bf16.mxu0 0
        %569 = vmatpush2.bf16.xpose.msra.mxu0 0
        %570 = vmatprep.subr.bf16.mxu0 0
        %571 = vmatpush2.bf16.xpose.msra.mxu0 0
        %572 = vmatprep.subr.bf16.mxu0 0
        %573 = vmatpush2.bf16.xpose.msra.mxu0 0
        %574 = vmatprep.mubr.bf16.mxu0 0
        %575 = vmatmul.mubr.bf16.gmra.mxu0 %v537
        %v576 = vpop.f32.mrf.mxu0
        %v577 = vadd.f32 0.0, %v576
        %v578 = vpop.f32.mrf.mxu0
        %v579 = vpop.f32.mrf.mxu0
        %v580 = vpop.f32.mrf.mxu0
        %581 = vdwg.mxu0
        %v582 = vmax.f32 %v577, -1e+09
        %v583 = vmin.f32 %v582, 1e+09
        %v584 = vsel %vm408, %v583, -1e+09
        %v585 = vsel %vm419, %v584, -inf
        %586 = vmax.xlane.f32.xlu0 %v585
        %v587 = vpop.xlane.xlu0 %586
        %v588 = vsub.f32 %v584, %v587
        %v589 = vmul.f32 %v588, 1.442695
        %v590 = vpow.pop %v589
        %v591 = vsel %vm419, %v590, 0.0
        %592 = vadd.xlane.f32.xlu0 %v591
        %v593 = vpop.xlane.xlu0 %592
        %v594 = vrcp.pop %v593
        %v595 = vmul.f32 %v590, %v594
        %v596 = vpack.c.bf16 %v595, %v595
        %597 = vrot.lane.b32.xlu0 %v415, 56
        %v598 = vpop.permute.xlu0 %597
        %v600 = vsel %vm419, %v596, 0
        %v603 = vsel %vm486, %v598, 0
        %605 = vmatprep.subr.bf16.mxu0 0
        %606 = vmatpush1.bf16.msra.mxu0 0
        %607 = vmatprep.subr.bf16.mxu0 0
        %608 = vmatpush1.bf16.msra.mxu0 0
        %609 = vmatprep.subr.bf16.mxu0 0
        %610 = vmatpush1.bf16.msra.mxu0 0
        %611 = vmatprep.subr.bf16.mxu0 0
        %612 = vmatpush1.bf16.msra.mxu0 0
        %613 = vmatprep.subr.bf16.mxu0 0
        %614 = vmatpush1.bf16.msra.mxu0 0
        %615 = vmatprep.subr.bf16.mxu0 0
        %616 = vmatpush1.bf16.msra.mxu0 0
        %617 = vmatprep.subr.bf16.mxu0 0
        %618 = vmatpush1.bf16.msra.mxu0 0
        %619 = vmatprep.subr.bf16.mxu0 0
        %620 = vmatpush1.bf16.msra.mxu0 %v603
        %621 = vmatprep.subr.bf16.mxu0 0
        %622 = vmatpush2.bf16.msra.mxu0 0
        %623 = vmatprep.subr.bf16.mxu0 0
        %624 = vmatpush2.bf16.msra.mxu0 0
        %625 = vmatprep.subr.bf16.mxu0 0
        %626 = vmatpush2.bf16.msra.mxu0 0
        %627 = vmatprep.subr.bf16.mxu0 0
        %628 = vmatpush2.bf16.msra.mxu0 0
        %629 = vmatprep.subr.bf16.mxu0 0
        %630 = vmatpush2.bf16.msra.mxu0 0
        %631 = vmatprep.subr.bf16.mxu0 0
        %632 = vmatpush2.bf16.msra.mxu0 0
        %633 = vmatprep.subr.bf16.mxu0 0
        %634 = vmatpush2.bf16.msra.mxu0 0
        %635 = vmatprep.subr.bf16.mxu0 0
        %636 = vmatpush2.bf16.msra.mxu0 0
        %637 = vmatprep.mubr.bf16.mxu0 0
        %638 = vmatmul.mubr.bf16.gmra.mxu0 %v600
        %v639 = vpop.f32.mrf.mxu0
        %v640 = vadd.f32 0.0, %v639
        %v641 = vpop.f32.mrf.mxu0
        %v642 = vpop.f32.mrf.mxu0
        %v643 = vpop.f32.mrf.mxu0
        %644 = vdwg.mxu0
        %v645 = vpack.c.bf16 %v640, %v640
        %v647 = vsel %vm419, %v645, 0
        %v650 = vsel %vm486, %v410, 0
        %652 = vmatprep.subr.bf16.mxu0 0
        %653 = vmatpush1.bf16.msra.mxu0 0
        %654 = vmatprep.subr.bf16.mxu0 0
        %655 = vmatpush1.bf16.msra.mxu0 0
        %656 = vmatprep.subr.bf16.mxu0 0
        %657 = vmatpush1.bf16.msra.mxu0 0
        %658 = vmatprep.subr.bf16.mxu0 0
        %659 = vmatpush1.bf16.msra.mxu0 0
        %660 = vmatprep.subr.bf16.mxu0 0
        %661 = vmatpush1.bf16.msra.mxu0 0
        %662 = vmatprep.subr.bf16.mxu0 0
        %663 = vmatpush1.bf16.msra.mxu0 0
        %664 = vmatprep.subr.bf16.mxu0 0
        %665 = vmatpush1.bf16.msra.mxu0 0
        %666 = vmatprep.subr.bf16.mxu0 0
        %667 = vmatpush1.bf16.msra.mxu0 %v650
        %668 = vmatprep.subr.bf16.mxu0 0
        %669 = vmatpush2.bf16.msra.mxu0 0
        %670 = vmatprep.subr.bf16.mxu0 0
        %671 = vmatpush2.bf16.msra.mxu0 0
        %672 = vmatprep.subr.bf16.mxu0 0
        %673 = vmatpush2.bf16.msra.mxu0 0
        %674 = vmatprep.subr.bf16.mxu0 0
        %675 = vmatpush2.bf16.msra.mxu0 0
        %676 = vmatprep.subr.bf16.mxu0 0
        %677 = vmatpush2.bf16.msra.mxu0 0
        %678 = vmatprep.subr.bf16.mxu0 0
        %679 = vmatpush2.bf16.msra.mxu0 0
        %680 = vmatprep.subr.bf16.mxu0 0
        %681 = vmatpush2.bf16.msra.mxu0 0
        %682 = vmatprep.subr.bf16.mxu0 0
        %683 = vmatpush2.bf16.msra.mxu0 0
        %684 = vmatprep.mubr.bf16.mxu0 0
        %685 = vmatmul.mubr.bf16.gmra.mxu0 %v647
        %v686 = vpop.f32.mrf.mxu0
        %v687 = vadd.f32 0.0, %v686
        %v688 = vpop.f32.mrf.mxu0
        %v689 = vpop.f32.mrf.mxu0
        %v690 = vpop.f32.mrf.mxu0
        %691 = vdwg.mxu0
        %v693 = vsel %vm419, %v530, 0
        %v696 = vsel %vm486, %v409, 0
        %698 = vmatprep.subr.bf16.mxu0 0
        %699 = vmatpush1.bf16.msra.mxu0 0
        %700 = vmatprep.subr.bf16.mxu0 0
        %701 = vmatpush1.bf16.msra.mxu0 0
        %702 = vmatprep.subr.bf16.mxu0 0
        %703 = vmatpush1.bf16.msra.mxu0 0
        %704 = vmatprep.subr.bf16.mxu0 0
        %705 = vmatpush1.bf16.msra.mxu0 0
        %706 = vmatprep.subr.bf16.mxu0 0
        %707 = vmatpush1.bf16.msra.mxu0 0
        %708 = vmatprep.subr.bf16.mxu0 0
        %709 = vmatpush1.bf16.msra.mxu0 0
        %710 = vmatprep.subr.bf16.mxu0 0
        %711 = vmatpush1.bf16.msra.mxu0 0
        %712 = vmatprep.subr.bf16.mxu0 0
        %713 = vmatpush1.bf16.msra.mxu0 %v696
        %714 = vmatprep.subr.bf16.mxu0 0
        %715 = vmatpush2.bf16.msra.mxu0 0
        %716 = vmatprep.subr.bf16.mxu0 0
        %717 = vmatpush2.bf16.msra.mxu0 0
        %718 = vmatprep.subr.bf16.mxu0 0
        %719 = vmatpush2.bf16.msra.mxu0 0
        %720 = vmatprep.subr.bf16.mxu0 0
        %721 = vmatpush2.bf16.msra.mxu0 0
        %722 = vmatprep.subr.bf16.mxu0 0
        %723 = vmatpush2.bf16.msra.mxu0 0
        %724 = vmatprep.subr.bf16.mxu0 0
        %725 = vmatpush2.bf16.msra.mxu0 0
        %726 = vmatprep.subr.bf16.mxu0 0
        %727 = vmatpush2.bf16.msra.mxu0 0
        %728 = vmatprep.subr.bf16.mxu0 0
        %729 = vmatpush2.bf16.msra.mxu0 0
        %730 = vmatprep.mubr.bf16.mxu0 0
        %731 = vmatmul.mubr.bf16.gmra.mxu0 %v693
        %v732 = vpop.f32.mrf.mxu0
        %v733 = vadd.f32 %v687, %v732
        %v734 = vpop.f32.mrf.mxu0
        %v735 = vpop.f32.mrf.mxu0
        %v736 = vpop.f32.mrf.mxu0
        %737 = vdwg.mxu0
        %738 = vrot.lane.b32.xlu0 %v414, 112
        %v739 = vpop.permute.xlu0 %738
        %740 = vrot.lane.b32.xlu0 %v415, 80
        %v741 = vpop.permute.xlu0 %740
        %v743 = vsel %vm419, %v739, 0
        %v746 = vsel %vm419, %v741, 0
        %748 = vmatprep.subr.bf16.mxu0 0
        %749 = vmatpush1.bf16.xpose.msra.mxu0 0
        %750 = vmatprep.subr.bf16.mxu0 0
        %751 = vmatpush1.bf16.xpose.msra.mxu0 0
        %752 = vmatprep.subr.bf16.mxu0 0
        %753 = vmatpush1.bf16.xpose.msra.mxu0 0
        %754 = vmatprep.subr.bf16.mxu0 0
        %755 = vmatpush1.bf16.xpose.msra.mxu0 0
        %756 = vmatprep.subr.bf16.mxu0 0
        %757 = vmatpush1.bf16.xpose.msra.mxu0 0
        %758 = vmatprep.subr.bf16.mxu0 0
        %759 = vmatpush1.bf16.xpose.msra.mxu0 0
        %760 = vmatprep.subr.bf16.mxu0 0
        %761 = vmatpush1.bf16.xpose.msra.mxu0 0
        %762 = vmatprep.subr.bf16.mxu0 0
        %763 = vmatpush1.bf16.xpose.msra.mxu0 %v746
        %764 = vmatprep.subr.bf16.mxu0 0
        %765 = vmatpush2.bf16.xpose.msra.mxu0 0
        %766 = vmatprep.subr.bf16.mxu0 0
        %767 = vmatpush2.bf16.xpose.msra.mxu0 0
        %768 = vmatprep.subr.bf16.mxu0 0
        %769 = vmatpush2.bf16.xpose.msra.mxu0 0
        %770 = vmatprep.subr.bf16.mxu0 0
        %771 = vmatpush2.bf16.xpose.msra.mxu0 0
        %772 = vmatprep.subr.bf16.mxu0 0
        %773 = vmatpush2.bf16.xpose.msra.mxu0 0
        %774 = vmatprep.subr.bf16.mxu0 0
        %775 = vmatpush2.bf16.xpose.msra.mxu0 0
        %776 = vmatprep.subr.bf16.mxu0 0
        %777 = vmatpush2.bf16.xpose.msra.mxu0 0
        %778 = vmatprep.subr.bf16.mxu0 0
        %779 = vmatpush2.bf16.xpose.msra.mxu0 0
        %780 = vmatprep.mubr.bf16.mxu0 0
        %781 = vmatmul.mubr.bf16.gmra.mxu0 %v743
        %v782 = vpop.f32.mrf.mxu0
        %v783 = vadd.f32 0.0, %v782
        %v784 = vpop.f32.mrf.mxu0
        %v785 = vpop.f32.mrf.mxu0
        %v786 = vpop.f32.mrf.mxu0
        %787 = vdwg.mxu0
        %v788 = vmax.f32 %v783, -1e+09
        %v789 = vmin.f32 %v788, 1e+09
        %v790 = vsel %vm408, %v789, -1e+09
        %v791 = vsel %vm419, %v790, -inf
        %792 = vmax.xlane.f32.xlu0 %v791
        %v793 = vpop.xlane.xlu0 %792
        %v794 = vsub.f32 %v790, %v793
        %v795 = vmul.f32 %v794, 1.442695
        %v796 = vpow.pop %v795
        %v797 = vsel %vm419, %v796, 0.0
        %798 = vadd.xlane.f32.xlu0 %v797
        %v799 = vpop.xlane.xlu0 %798
        %v800 = vrcp.pop %v799
        %v801 = vmul.f32 %v796, %v800
        %v802 = vpack.c.bf16 %v801, %v801
        %803 = vrot.lane.b32.xlu0 %v415, 48
        %v804 = vpop.permute.xlu0 %803
        %v806 = vsel %vm419, %v802, 0
        %v809 = vsel %vm486, %v804, 0
        %811 = vmatprep.subr.bf16.mxu0 0
        %812 = vmatpush1.bf16.msra.mxu0 0
        %813 = vmatprep.subr.bf16.mxu0 0
        %814 = vmatpush1.bf16.msra.mxu0 0
        %815 = vmatprep.subr.bf16.mxu0 0
        %816 = vmatpush1.bf16.msra.mxu0 0
        %817 = vmatprep.subr.bf16.mxu0 0
        %818 = vmatpush1.bf16.msra.mxu0 0
        %819 = vmatprep.subr.bf16.mxu0 0
        %820 = vmatpush1.bf16.msra.mxu0 0
        %821 = vmatprep.subr.bf16.mxu0 0
        %822 = vmatpush1.bf16.msra.mxu0 0
        %823 = vmatprep.subr.bf16.mxu0 0
        %824 = vmatpush1.bf16.msra.mxu0 0
        %825 = vmatprep.subr.bf16.mxu0 0
        %826 = vmatpush1.bf16.msra.mxu0 %v809
        %827 = vmatprep.subr.bf16.mxu0 0
        %828 = vmatpush2.bf16.msra.mxu0 0
        %829 = vmatprep.subr.bf16.mxu0 0
        %830 = vmatpush2.bf16.msra.mxu0 0
        %831 = vmatprep.subr.bf16.mxu0 0
        %832 = vmatpush2.bf16.msra.mxu0 0
        %833 = vmatprep.subr.bf16.mxu0 0
        %834 = vmatpush2.bf16.msra.mxu0 0
        %835 = vmatprep.subr.bf16.mxu0 0
        %836 = vmatpush2.bf16.msra.mxu0 0
        %837 = vmatprep.subr.bf16.mxu0 0
        %838 = vmatpush2.bf16.msra.mxu0 0
        %839 = vmatprep.subr.bf16.mxu0 0
        %840 = vmatpush2.bf16.msra.mxu0 0
        %841 = vmatprep.subr.bf16.mxu0 0
        %842 = vmatpush2.bf16.msra.mxu0 0
        %843 = vmatprep.mubr.bf16.mxu0 0
        %844 = vmatmul.mubr.bf16.gmra.mxu0 %v806
        %v845 = vpop.f32.mrf.mxu0
        %v846 = vadd.f32 0.0, %v845
        %v847 = vpop.f32.mrf.mxu0
        %v848 = vpop.f32.mrf.mxu0
        %v849 = vpop.f32.mrf.mxu0
        %850 = vdwg.mxu0
        %v851 = vpack.c.bf16 %v846, %v846
        %v853 = vsel %vm419, %v851, 0
        %v856 = vsel %vm486, %v411, 0
        %858 = vmatprep.subr.bf16.mxu0 0
        %859 = vmatpush1.bf16.msra.mxu0 0
        %860 = vmatprep.subr.bf16.mxu0 0
        %861 = vmatpush1.bf16.msra.mxu0 0
        %862 = vmatprep.subr.bf16.mxu0 0
        %863 = vmatpush1.bf16.msra.mxu0 0
        %864 = vmatprep.subr.bf16.mxu0 0
        %865 = vmatpush1.bf16.msra.mxu0 0
        %866 = vmatprep.subr.bf16.mxu0 0
        %867 = vmatpush1.bf16.msra.mxu0 0
        %868 = vmatprep.subr.bf16.mxu0 0
        %869 = vmatpush1.bf16.msra.mxu0 0
        %870 = vmatprep.subr.bf16.mxu0 0
        %871 = vmatpush1.bf16.msra.mxu0 0
        %872 = vmatprep.subr.bf16.mxu0 0
        %873 = vmatpush1.bf16.msra.mxu0 %v856
        %874 = vmatprep.subr.bf16.mxu0 0
        %875 = vmatpush2.bf16.msra.mxu0 0
        %876 = vmatprep.subr.bf16.mxu0 0
        %877 = vmatpush2.bf16.msra.mxu0 0
        %878 = vmatprep.subr.bf16.mxu0 0
        %879 = vmatpush2.bf16.msra.mxu0 0
        %880 = vmatprep.subr.bf16.mxu0 0
        %881 = vmatpush2.bf16.msra.mxu0 0
        %882 = vmatprep.subr.bf16.mxu0 0
        %883 = vmatpush2.bf16.msra.mxu0 0
        %884 = vmatprep.subr.bf16.mxu0 0
        %885 = vmatpush2.bf16.msra.mxu0 0
        %886 = vmatprep.subr.bf16.mxu0 0
        %887 = vmatpush2.bf16.msra.mxu0 0
        %888 = vmatprep.subr.bf16.mxu0 0
        %889 = vmatpush2.bf16.msra.mxu0 0
        %890 = vmatprep.mubr.bf16.mxu0 0
        %891 = vmatmul.mubr.bf16.gmra.mxu0 %v853
        %v892 = vpop.f32.mrf.mxu0
        %v893 = vadd.f32 0.0, %v892
        %v894 = vpop.f32.mrf.mxu0
        %v895 = vpop.f32.mrf.mxu0
        %v896 = vpop.f32.mrf.mxu0
        %897 = vdwg.mxu0
        %v898 = vadd.f32 %v733, %v893
        %899 = vrot.lane.b32.xlu0 %v414, 104
        %v900 = vpop.permute.xlu0 %899
        %901 = vrot.lane.b32.xlu0 %v415, 72
        %v902 = vpop.permute.xlu0 %901
        %v904 = vsel %vm419, %v900, 0
        %v907 = vsel %vm419, %v902, 0
        %909 = vmatprep.subr.bf16.mxu0 0
        %910 = vmatpush1.bf16.xpose.msra.mxu0 0
        %911 = vmatprep.subr.bf16.mxu0 0
        %912 = vmatpush1.bf16.xpose.msra.mxu0 0
        %913 = vmatprep.subr.bf16.mxu0 0
        %914 = vmatpush1.bf16.xpose.msra.mxu0 0
        %915 = vmatprep.subr.bf16.mxu0 0
        %916 = vmatpush1.bf16.xpose.msra.mxu0 0
        %917 = vmatprep.subr.bf16.mxu0 0
        %918 = vmatpush1.bf16.xpose.msra.mxu0 0
        %919 = vmatprep.subr.bf16.mxu0 0
        %920 = vmatpush1.bf16.xpose.msra.mxu0 0
        %921 = vmatprep.subr.bf16.mxu0 0
        %922 = vmatpush1.bf16.xpose.msra.mxu0 0
        %923 = vmatprep.subr.bf16.mxu0 0
        %924 = vmatpush1.bf16.xpose.msra.mxu0 %v907
        %925 = vmatprep.subr.bf16.mxu0 0
        %926 = vmatpush2.bf16.xpose.msra.mxu0 0
        %927 = vmatprep.subr.bf16.mxu0 0
        %928 = vmatpush2.bf16.xpose.msra.mxu0 0
        %929 = vmatprep.subr.bf16.mxu0 0
        %930 = vmatpush2.bf16.xpose.msra.mxu0 0
        %931 = vmatprep.subr.bf16.mxu0 0
        %932 = vmatpush2.bf16.xpose.msra.mxu0 0
        %933 = vmatprep.subr.bf16.mxu0 0
        %934 = vmatpush2.bf16.xpose.msra.mxu0 0
        %935 = vmatprep.subr.bf16.mxu0 0
        %936 = vmatpush2.bf16.xpose.msra.mxu0 0
        %937 = vmatprep.subr.bf16.mxu0 0
        %938 = vmatpush2.bf16.xpose.msra.mxu0 0
        %939 = vmatprep.subr.bf16.mxu0 0
        %940 = vmatpush2.bf16.xpose.msra.mxu0 0
        %941 = vmatprep.mubr.bf16.mxu0 0
        %942 = vmatmul.mubr.bf16.gmra.mxu0 %v904
        %v943 = vpop.f32.mrf.mxu0
        %v944 = vadd.f32 0.0, %v943
        %v945 = vpop.f32.mrf.mxu0
        %v946 = vpop.f32.mrf.mxu0
        %v947 = vpop.f32.mrf.mxu0
        %948 = vdwg.mxu0
        %v949 = vmax.f32 %v944, -1e+09
        %v950 = vmin.f32 %v949, 1e+09
        %v951 = vsel %vm408, %v950, -1e+09
        %v952 = vsel %vm419, %v951, -inf
        %953 = vmax.xlane.f32.xlu0 %v952
        %v954 = vpop.xlane.xlu0 %953
        %v955 = vsub.f32 %v951, %v954
        %v956 = vmul.f32 %v955, 1.442695
        %v957 = vpow.pop %v956
        %v958 = vsel %vm419, %v957, 0.0
        %959 = vadd.xlane.f32.xlu0 %v958
        %v960 = vpop.xlane.xlu0 %959
        %v961 = vrcp.pop %v960
        %v962 = vmul.f32 %v957, %v961
        %v963 = vpack.c.bf16 %v962, %v962
        %964 = vrot.lane.b32.xlu0 %v415, 40
        %v965 = vpop.permute.xlu0 %964
        %v967 = vsel %vm419, %v963, 0
        %v970 = vsel %vm486, %v965, 0
        %972 = vmatprep.subr.bf16.mxu0 0
        %973 = vmatpush1.bf16.msra.mxu0 0
        %974 = vmatprep.subr.bf16.mxu0 0
        %975 = vmatpush1.bf16.msra.mxu0 0
        %976 = vmatprep.subr.bf16.mxu0 0
        %977 = vmatpush1.bf16.msra.mxu0 0
        %978 = vmatprep.subr.bf16.mxu0 0
        %979 = vmatpush1.bf16.msra.mxu0 0
        %980 = vmatprep.subr.bf16.mxu0 0
        %981 = vmatpush1.bf16.msra.mxu0 0
        %982 = vmatprep.subr.bf16.mxu0 0
        %983 = vmatpush1.bf16.msra.mxu0 0
        %984 = vmatprep.subr.bf16.mxu0 0
        %985 = vmatpush1.bf16.msra.mxu0 0
        %986 = vmatprep.subr.bf16.mxu0 0
        %987 = vmatpush1.bf16.msra.mxu0 %v970
        %988 = vmatprep.subr.bf16.mxu0 0
        %989 = vmatpush2.bf16.msra.mxu0 0
        %990 = vmatprep.subr.bf16.mxu0 0
        %991 = vmatpush2.bf16.msra.mxu0 0
        %992 = vmatprep.subr.bf16.mxu0 0
        %993 = vmatpush2.bf16.msra.mxu0 0
        %994 = vmatprep.subr.bf16.mxu0 0
        %995 = vmatpush2.bf16.msra.mxu0 0
        %996 = vmatprep.subr.bf16.mxu0 0
        %997 = vmatpush2.bf16.msra.mxu0 0
        %998 = vmatprep.subr.bf16.mxu0 0
        %999 = vmatpush2.bf16.msra.mxu0 0
        %1000 = vmatprep.subr.bf16.mxu0 0
        %1001 = vmatpush2.bf16.msra.mxu0 0
        %1002 = vmatprep.subr.bf16.mxu0 0
        %1003 = vmatpush2.bf16.msra.mxu0 0
        %1004 = vmatprep.mubr.bf16.mxu0 0
        %1005 = vmatmul.mubr.bf16.gmra.mxu0 %v967
        %v1006 = vpop.f32.mrf.mxu0
        %v1007 = vadd.f32 0.0, %v1006
        %v1008 = vpop.f32.mrf.mxu0
        %v1009 = vpop.f32.mrf.mxu0
        %v1010 = vpop.f32.mrf.mxu0
        %1011 = vdwg.mxu0
        %v1012 = vpack.c.bf16 %v1007, %v1007
        %v1014 = vsel %vm419, %v1012, 0
        %v1017 = vsel %vm486, %v412, 0
        %1019 = vmatprep.subr.bf16.mxu0 0
        %1020 = vmatpush1.bf16.msra.mxu0 0
        %1021 = vmatprep.subr.bf16.mxu0 0
        %1022 = vmatpush1.bf16.msra.mxu0 0
        %1023 = vmatprep.subr.bf16.mxu0 0
        %1024 = vmatpush1.bf16.msra.mxu0 0
        %1025 = vmatprep.subr.bf16.mxu0 0
        %1026 = vmatpush1.bf16.msra.mxu0 0
        %1027 = vmatprep.subr.bf16.mxu0 0
        %1028 = vmatpush1.bf16.msra.mxu0 0
        %1029 = vmatprep.subr.bf16.mxu0 0
        %1030 = vmatpush1.bf16.msra.mxu0 0
        %1031 = vmatprep.subr.bf16.mxu0 0
        %1032 = vmatpush1.bf16.msra.mxu0 0
        %1033 = vmatprep.subr.bf16.mxu0 0
        %1034 = vmatpush1.bf16.msra.mxu0 %v1017
        %1035 = vmatprep.subr.bf16.mxu0 0
        %1036 = vmatpush2.bf16.msra.mxu0 0
        %1037 = vmatprep.subr.bf16.mxu0 0
        %1038 = vmatpush2.bf16.msra.mxu0 0
        %1039 = vmatprep.subr.bf16.mxu0 0
        %1040 = vmatpush2.bf16.msra.mxu0 0
        %1041 = vmatprep.subr.bf16.mxu0 0
        %1042 = vmatpush2.bf16.msra.mxu0 0
        %1043 = vmatprep.subr.bf16.mxu0 0
        %1044 = vmatpush2.bf16.msra.mxu0 0
        %1045 = vmatprep.subr.bf16.mxu0 0
        %1046 = vmatpush2.bf16.msra.mxu0 0
        %1047 = vmatprep.subr.bf16.mxu0 0
        %1048 = vmatpush2.bf16.msra.mxu0 0
        %1049 = vmatprep.subr.bf16.mxu0 0
        %1050 = vmatpush2.bf16.msra.mxu0 0
        %1051 = vmatprep.mubr.bf16.mxu0 0
        %1052 = vmatmul.mubr.bf16.gmra.mxu0 %v1014
        %v1053 = vpop.f32.mrf.mxu0
        %v1054 = vadd.f32 0.0, %v1053
        %v1055 = vpop.f32.mrf.mxu0
        %v1056 = vpop.f32.mrf.mxu0
        %v1057 = vpop.f32.mrf.mxu0
        %1058 = vdwg.mxu0
        %v1059 = vadd.f32 %v898, %v1054
        %v1060 = vld [vmem:[%s5] sm:$0x1]
        %v1062 = vlaneseq
        %v1063 = vshrl.u32 %v1062, 7
        %v1064 = vsub.s32 0, %v1063
        %v1065 = vrot.slane %v1060, %v1064
        %v1067 = vadd.f32 %v1059, %v1065
        %v1068 = vadd.f32 %v329, %v1067
        %v1069 = vld [vmem:[%s6] sm:$0x1]
        %v1070 = vld [vmem:[%s7] sm:$0x1]
        %v1071 = vsel %vm354, %v1068, 0.0
        %1072 = vadd.xlane.f32.xlu0 %v1071
        %v1073 = vpop.xlane.xlu0 %1072
        %v1074 = vrcp.pop 32.0
        %v1075 = vmul.f32 %v1073, %v1074
        %v1076 = vsub.f32 %v1068, %v1075
        %v1077 = vmul.f32 %v1076, %v1076
        %v1078 = vsel %vm354, %v1077, 0.0
        %1079 = vadd.xlane.f32.xlu0 %v1078
        %v1080 = vpop.xlane.xlu0 %1079
        %v1081 = vmul.f32 %v1080, %v1074
        %v1082 = vadd.f32 %v1081, 1e-05
        %v1083 = vrsqrt.pop %v1082
        %v1084 = vmul.f32 %v1076, %v1083
        %v1086 = vlaneseq
        %v1087 = vshrl.u32 %v1086, 7
        %v1088 = vsub.s32 0, %v1087
        %v1089 = vrot.slane %v1069, %v1088
        %v1091 = vmul.f32 %v1089, %v1084
        %v1093 = vlaneseq
        %v1094 = vshrl.u32 %v1093, 7
        %v1095 = vsub.s32 0, %v1094
        %v1096 = vrot.slane %v1070, %v1095
        %v1098 = vadd.f32 %v1091, %v1096
        %1099 = vst.msk [vmem:[%s327] sm:$0xff] %vm354, %v1098
        %s1100 = sand.u32 %s190, 1
        %s1101 = scalar_lea.sflag [#allocation6], %s1100
        %s1102 = sand.u32 %s190, 1
        %s1103 = smul.addr %s1102, 8
        %s1104 = scalar_lea.vmem [#allocation10], %s1103
        // Predicated region
        $region61: #{tpu_custom_call.1} parent=47 // pred_check
          %p1105 = pneg %p200
        $region62: #{tpu_custom_call.1} parent=47 // pred_check_branch
          %1107 = sbr.rel (%p1105) target = $region64
        $region63: #{tpu_custom_call.1} parent=47 // pred_region
          %s1109 = ssub.s32 128, 128
          %1110 = vsyncadd %s1101, %s1109
          %s1111 = smul.addr %s30, 128
          %s1112 = scalar_lea.hbm %s8, %s1111
          %s1114 = sshll.u32 %s1104, 4
          %s1115 = int_to_ptr.vmem [resolvable:$true] %s1114
          %1117 = dma.vmem_to_hbm [thread:$0]  %s1115, 128, %s1112, %s1101
        $region64: #{tpu_custom_call.1} parent=47 // pred_fallthru
          _
      $region48: #{tpu_custom_call.1} parent=5 // pred_fallthru
        _
      %p1118 = scmp.le.s32.totalorder 2, %s25
      // Predicated region
      $region65: #{tpu_custom_call.1} parent=5 // pred_check
        %p1119 = pneg %p1118
      $region66: #{tpu_custom_call.1} parent=5 // pred_check_branch
        %1121 = sbr.rel (%p1119) target = $region68
      $region67: #{tpu_custom_call.1} parent=5 // pred_region
        %s1122 = ssub.s32 %s25, 2
        // Predicated region
        $region69: #{tpu_custom_call.1} parent=67 // pred_check
          %p1123 = pneg %p206
        $region70: #{tpu_custom_call.1} parent=67 // pred_check_branch
          %1125 = sbr.rel (%p1123) target = $region72
        $region71: #{tpu_custom_call.1} parent=67 // pred_region
          %s1126 = sand.u32 %s191, 1
          %s1127 = scalar_lea.sflag [#allocation6], %s1126
          %s1128 = sand.u32 %s191, 1
          %s1129 = smul.addr %s1128, 8
          %s1130 = scalar_lea.vmem [#allocation10], %s1129
          %1131 = dma.done %s1127, 128
        $region72: #{tpu_custom_call.1} parent=67 // pred_fallthru
          _
      $region68: #{tpu_custom_call.1} parent=5 // pred_fallthru
        _
    $region6: #{tpu_custom_call.1} parent=1 // loop_footer
      %s29 = sadd.s32 1, %s25
    $region7: #{tpu_custom_call.1} parent=1 // loop_footer_branch
      %24 = sbr.rel target = $region3
    $region8: #{tpu_custom_call.1} parent=1 // loop_exit
      _
    %1132 = vsyncpa [#allocation5], 1
    %s1133 = scalar_lea.sflag [#allocation5], 1
    %1134 = vsyncpa %s1133, 1
    %1135 = vsyncpa [#allocation8], 1
    %1136 = vsyncpa [#allocation6], 1
    %s1137 = scalar_lea.sflag [#allocation6], 1
    %1138 = vsyncpa %s1137, 1

</llo_original>
